<compile_context>
chip_gen: v7x
topology: tpu7x:2x2x1
jax: 0.10.0
libtpu: 0.0.40
codegen_flags: <defaults>
</compile_context>

<pallas_src>
import functools

import jax
import jax.numpy as jnp
from jax import lax
from jax.experimental import pallas as pl
from jax.experimental.pallas import tpu as pltpu

LATENT_SIZE = 64
HIDDEN = (128, 256, 256, 256)
OUT_SIZE = 784
BN_EPS = 1e-5
LRELU_SLOPE = 0.2


# ----------------------------------------------------------------------------
# Kernel
# ----------------------------------------------------------------------------
def _generator_kernel(x_ref, w1_ref, w2_ref, w3_ref, w4_ref, gb_ref, b5_ref,
                      w5_hbm, out_ref, w5_buf, w5_sem, *, use_bf16_tanh):
    # Kick off the largest input transfer (W5) immediately so its HBM->VMEM
    # DMA overlaps with the layer 1-4 compute.
    w5_copy = pltpu.make_async_copy(w5_hbm, w5_buf, w5_sem)
    w5_copy.start()

    inv_b = 1.0 / x_ref.shape[0]   # static batch size

    def bn_lrelu(h, row, width):
        # gb_ref rows: gamma1, beta1, gamma2, beta2, gamma3, beta3, gamma4, beta4
        gamma = gb_ref[row:row + 1, :width]
        beta = gb_ref[row + 1:row + 2, :width]
        # One-pass training-mode batch stats (biased variance, clamped >= 0
        # against f32 cancellation).
        s1 = jnp.sum(h, axis=0, keepdims=True)
        s2 = jnp.sum(h * h, axis=0, keepdims=True)
        mean = s1 * inv_b
        var = jnp.maximum(s2 * inv_b - mean * mean, 0.0)
        hn = (h - mean) * lax.rsqrt(var + BN_EPS)
        hn = hn * gamma + beta
        return jnp.where(hn > 0, hn, LRELU_SLOPE * hn)

    # Layers 1-4.  Pre-BN biases dropped (cancelled by BN mean subtraction).
    h = jnp.dot(x_ref[...], w1_ref[...], preferred_element_type=jnp.float32)
    h = bn_lrelu(h, 0, HIDDEN[0])

    h = jnp.dot(h.astype(jnp.bfloat16), w2_ref[...],
                preferred_element_type=jnp.float32)
    h = bn_lrelu(h, 2, HIDDEN[1])

    h = jnp.dot(h.astype(jnp.bfloat16), w3_ref[...],
                preferred_element_type=jnp.float32)
    h = bn_lrelu(h, 4, HIDDEN[2])

    h = jnp.dot(h.astype(jnp.bfloat16), w4_ref[...],
                preferred_element_type=jnp.float32)
    h = bn_lrelu(h, 6, HIDDEN[3])

    # Layer 5: wait for the prefetched W5, matmul, +bias, tanh, bf16 store.
    w5_copy.wait()
    h = jnp.dot(h.astype(jnp.bfloat16), w5_buf[...],
                preferred_element_type=jnp.float32)
    h = h + b5_ref[...]
    if use_bf16_tanh:
        # v6e / v7x: bf16 EUP -> half the tanh pushes; output is bf16 anyway.
        out_ref[...] = jnp.tanh(h.astype(jnp.bfloat16))
    else:
        # v5e: no bf16 EUP -> tanh in f32, cast only for the store.
        out_ref[...] = jnp.tanh(h).astype(jnp.bfloat16)


# ----------------------------------------------------------------------------
# Parameter construction / packing
# ----------------------------------------------------------------------------
def init_params(key):
    """f32 params mirroring PyTorch default Linear/BatchNorm1d init."""
    dims = (LATENT_SIZE,) + HIDDEN + (OUT_SIZE,)
    ws, bs, gs, betas = [], [], [], []
    for i in range(5):
        fan_in, fan_out = dims[i], dims[i + 1]
        key, kw, kb = jax.random.split(key, 3)
        bound = float(fan_in) ** -0.5
        # stored as (in, out) so the kernel computes x @ W
        ws.append(jax.random.uniform(kw, (fan_in, fan_out), jnp.float32,
                                     -bound, bound))
        bs.append(jax.random.uniform(kb, (fan_out,), jnp.float32,
                                     -bound, bound))
        if i < 4:  # BatchNorm1d defaults: gamma=1, beta=0
            gs.append(jnp.ones((fan_out,), jnp.float32))
            betas.append(jnp.zeros((fan_out,), jnp.float32))
    return ws, bs, gs, betas


def pack_params(ws, bs, gs, betas):
    """Convert f32 params to the kernel format.

    NOTE: b1..b4 are intentionally NOT passed: a Linear bias added before
    training-mode BatchNorm is cancelled by the mean subtraction.  Eval-mode
    (running-stats) BN would need them reinstated.
    """
    w_bf16 = tuple(w.astype(jnp.bfloat16) for w in ws)     # (in, out) layout
    gb = jnp.zeros((8, max(HIDDEN)), jnp.float32)           # (8, 256)
    for i in range(4):
        n = HIDDEN[i]
        gb = gb.at[2 * i, :n].set(gs[i])
        gb = gb.at[2 * i + 1, :n].set(betas[i])
    b5 = bs[4].reshape(1, OUT_SIZE).astype(jnp.float32)      # (1, 784)
    return (*w_bf16, gb, b5)   # (w1, w2, w3, w4, w5, gb, b5)


# ----------------------------------------------------------------------------
# Wrapper
# ----------------------------------------------------------------------------
def generator_forward(x, params, use_bf16_tanh=None):
    w1, w2, w3, w4, w5, gb, b5 = params
    if use_bf16_tanh is None:
        kind = jax.devices()[0].device_kind.lower()
        use_bf16_tanh = ("v6" in kind) or ("v7" in kind)

    B = x.shape[0]
    x = x.astype(jnp.bfloat16)   # half the input DMA; MXU operand dtype

    vmem = pl.BlockSpec(memory_space=pltpu.MemorySpace.VMEM)
    kernel = functools.partial(_generator_kernel, use_bf16_tanh=use_bf16_tanh)

    return pl.pallas_call(
        kernel,
        out_shape=jax.ShapeDtypeStruct((B, OUT_SIZE), jnp.bfloat16),
        in_specs=[vmem] * 7 + [pl.BlockSpec(memory_space=pl.ANY)],  # w5 stays in HBM
        out_specs=vmem,
        scratch_shapes=[
            pltpu.VMEM((HIDDEN[3], OUT_SIZE), jnp.bfloat16),  # W5 landing buffer
            pltpu.SemaphoreType.DMA(()),
        ],
    )(x, w1, w2, w3, w4, gb, b5, w5)


# ----------------------------------------------------------------------------
# Pure-JAX references for validation
# ----------------------------------------------------------------------------
def _bn_lrelu_ref(h, g, be):
    mean = jnp.mean(h, axis=0, keepdims=True)
    var = jnp.mean((h - mean) ** 2, axis=0, keepdims=True)
    hn = (h - mean) / jnp.sqrt(var + BN_EPS) * g + be
    return jnp.where(hn > 0, hn, LRELU_SLOPE * hn)


def generator_reference(x, ws, bs, gs, betas):
    """Faithful f32 PyTorch-semantics reference (biases included)."""
    h = x
    for i in range(4):
        h = _bn_lrelu_ref(h @ ws[i] + bs[i], gs[i], betas[i])
    return jnp.tanh(h @ ws[4] + bs[4])


def generator_reference_bf16(x, ws, bs, gs, betas):
    """Same network with bf16 matmul operands / f32 accumulation (kernel math)."""
    def mm(a, w):
        return jnp.dot(a.astype(jnp.bfloat16), w.astype(jnp.bfloat16),
                       preferred_element_type=jnp.float32)
    h = x
    for i in range(4):
        h = _bn_lrelu_ref(mm(h, ws[i]) + bs[i], gs[i], betas[i])
    return jnp.tanh(mm(h, ws[4]) + bs[4])


if __name__ == "__main__":
    key = jax.random.PRNGKey(0)
    key, kx = jax.random.split(key)
    B = 8   # small demo batch (>=2 needed for training-mode BatchNorm)
    x = jax.random.normal(kx, (B, LATENT_SIZE), jnp.float32)

    ws, bs, gs, betas = init_params(key)
    kparams = pack_params(ws, bs, gs, betas)

    out = generator_forward(x, kparams)
    out = jax.block_until_ready(out)
    assert out.shape == (B, OUT_SIZE), out.shape
    assert out.dtype == jnp.bfloat16, out.dtype
    out_f32 = out.astype(jnp.float32)

    # 1) vs a reference that uses the same bf16-operand matmul math: tight-ish
    #    (covers bf16 tanh-input/output rounding).
    ref_bf16 = generator_reference_bf16(x, ws, bs, gs, betas)
    err_bf16 = float(jnp.max(jnp.abs(out_f32 - ref_bf16)))
    assert err_bf16 < 5e-2, f"mismatch vs bf16-matmul reference: {err_bf16}"

    # 2) vs the faithful f32 reference: tolerance covers bf16 operand/output
    #    quantization accumulated through 5 layers (tanh-bounded outputs).
    ref_f32 = generator_reference(x, ws, bs, gs, betas)
    err_f32 = float(jnp.max(jnp.abs(out_f32 - ref_f32)))
    assert err_f32 < 1.2e-1, f"mismatch vs f32 reference: {err_f32}"

    print("KERNEL_OK")
</pallas_src>

<mosaic_0001>
module attributes {stable_mosaic.version = 11 : i64} {
  func.func @_generator_kernel(%arg0: memref<8x64xbf16, #tpu.memory_space<vmem>>, %arg1: memref<64x128xbf16, #tpu.memory_space<vmem>>, %arg2: memref<128x256xbf16, #tpu.memory_space<vmem>>, %arg3: memref<256x256xbf16, #tpu.memory_space<vmem>>, %arg4: memref<256x256xbf16, #tpu.memory_space<vmem>>, %arg5: memref<8x256xf32, #tpu.memory_space<vmem>>, %arg6: memref<1x784xf32, #tpu.memory_space<vmem>>, %arg7: memref<256x784xbf16, #tpu.memory_space<any>>, %arg8: memref<8x784xbf16, #tpu.memory_space<vmem>>, %arg9: memref<256x784xbf16, #tpu.memory_space<vmem>>, %arg10: memref<!tpu.dma_semaphore, #tpu.memory_space<semaphore_mem>>) attributes {dimension_semantics = [], scalar_prefetch = 0 : i64, scratch_operands = 2 : i64, tpu.core_type = #tpu.core_type<tc>} {
    tpu.enqueue_dma source(%arg7 : memref<256x784xbf16, #tpu.memory_space<any>>) target(%arg9 : memref<256x784xbf16, #tpu.memory_space<vmem>>) target_semaphore(%arg10 : memref<!tpu.dma_semaphore, #tpu.memory_space<semaphore_mem>>)
    %c0 = arith.constant 0 : index
    %c0_0 = arith.constant 0 : index
    %0 = vector.load %arg0[%c0, %c0_0] : memref<8x64xbf16, #tpu.memory_space<vmem>>, vector<8x64xbf16>
    %c0_1 = arith.constant 0 : index
    %c0_2 = arith.constant 0 : index
    %1 = vector.load %arg1[%c0_1, %c0_2] : memref<64x128xbf16, #tpu.memory_space<vmem>>, vector<64x128xbf16>
    %cst = arith.constant dense<0.000000e+00> : vector<8x128xf32>
    %2 = tpu.matmul %0, %1, %cst {dimension_numbers = #tpu.dot_dimension_numbers<[1], [0], [0], [1], [0, 0, 1, 1], [], []>} : vector<8x64xbf16>, vector<64x128xbf16>, vector<8x128xf32> -> vector<8x128xf32>
    %c0_3 = arith.constant 0 : index
    %c0_4 = arith.constant 0 : index
    %3 = vector.load %arg5[%c0_3, %c0_4] : memref<8x256xf32, #tpu.memory_space<vmem>>, vector<1x128xf32>
    %c1 = arith.constant 1 : index
    %c0_5 = arith.constant 0 : index
    %4 = vector.load %arg5[%c1, %c0_5] : memref<8x256xf32, #tpu.memory_space<vmem>>, vector<1x128xf32>
    %cst_6 = arith.constant dense<0.000000e+00> : vector<128xf32>
    %5 = vector.multi_reduction <add>, %2, %cst_6 [0] : vector<8x128xf32> to vector<128xf32>
    %6 = vector.shape_cast %5 : vector<128xf32> to vector<1x128xf32>
    %7 = arith.mulf %2, %2 : vector<8x128xf32>
    %cst_7 = arith.constant dense<0.000000e+00> : vector<128xf32>
    %8 = vector.multi_reduction <add>, %7, %cst_7 [0] : vector<8x128xf32> to vector<128xf32>
    %9 = vector.shape_cast %8 : vector<128xf32> to vector<1x128xf32>
    %cst_8 = arith.constant 1.250000e-01 : f32
    %10 = vector.broadcast %cst_8 : f32 to vector<1x128xf32>
    %11 = arith.mulf %6, %10 : vector<1x128xf32>
    %cst_9 = arith.constant 1.250000e-01 : f32
    %12 = vector.broadcast %cst_9 : f32 to vector<1x128xf32>
    %13 = arith.mulf %9, %12 : vector<1x128xf32>
    %14 = arith.mulf %11, %11 : vector<1x128xf32>
    %15 = arith.subf %13, %14 : vector<1x128xf32>
    %cst_10 = arith.constant 0.000000e+00 : f32
    %16 = vector.broadcast %cst_10 : f32 to vector<1x128xf32>
    %17 = arith.maximumf %15, %16 : vector<1x128xf32>
    %18 = vector.broadcast %11 : vector<1x128xf32> to vector<8x128xf32>
    %19 = arith.subf %2, %18 : vector<8x128xf32>
    %cst_11 = arith.constant 9.99999974E-6 : f32
    %20 = vector.broadcast %cst_11 : f32 to vector<1x128xf32>
    %21 = arith.addf %17, %20 : vector<1x128xf32>
    %22 = math.rsqrt %21 : vector<1x128xf32>
    %23 = vector.broadcast %22 : vector<1x128xf32> to vector<8x128xf32>
    %24 = arith.mulf %19, %23 : vector<8x128xf32>
    %25 = vector.broadcast %3 : vector<1x128xf32> to vector<8x128xf32>
    %26 = arith.mulf %24, %25 : vector<8x128xf32>
    %27 = vector.broadcast %4 : vector<1x128xf32> to vector<8x128xf32>
    %28 = arith.addf %26, %27 : vector<8x128xf32>
    %cst_12 = arith.constant 0.000000e+00 : f32
    %29 = vector.broadcast %cst_12 : f32 to vector<8x128xf32>
    %30 = arith.cmpf ogt, %28, %29 : vector<8x128xf32>
    %cst_13 = arith.constant 2.000000e-01 : f32
    %31 = vector.broadcast %cst_13 : f32 to vector<8x128xf32>
    %32 = arith.mulf %31, %28 : vector<8x128xf32>
    %33 = arith.select %30, %28, %32 : vector<8x128xi1>, vector<8x128xf32>
    %34 = arith.truncf %33 : vector<8x128xf32> to vector<8x128xbf16>
    %c0_14 = arith.constant 0 : index
    %c0_15 = arith.constant 0 : index
    %35 = vector.load %arg2[%c0_14, %c0_15] : memref<128x256xbf16, #tpu.memory_space<vmem>>, vector<128x256xbf16>
    %cst_16 = arith.constant dense<0.000000e+00> : vector<8x256xf32>
    %36 = tpu.matmul %34, %35, %cst_16 {dimension_numbers = #tpu.dot_dimension_numbers<[1], [0], [0], [1], [0, 0, 1, 1], [], []>} : vector<8x128xbf16>, vector<128x256xbf16>, vector<8x256xf32> -> vector<8x256xf32>
    %c2 = arith.constant 2 : index
    %c0_17 = arith.constant 0 : index
    %37 = vector.load %arg5[%c2, %c0_17] : memref<8x256xf32, #tpu.memory_space<vmem>>, vector<1x256xf32>
    %c3 = arith.constant 3 : index
    %c0_18 = arith.constant 0 : index
    %38 = vector.load %arg5[%c3, %c0_18] : memref<8x256xf32, #tpu.memory_space<vmem>>, vector<1x256xf32>
    %cst_19 = arith.constant dense<0.000000e+00> : vector<256xf32>
    %39 = vector.multi_reduction <add>, %36, %cst_19 [0] : vector<8x256xf32> to vector<256xf32>
    %40 = vector.shape_cast %39 : vector<256xf32> to vector<1x256xf32>
    %41 = arith.mulf %36, %36 : vector<8x256xf32>
    %cst_20 = arith.constant dense<0.000000e+00> : vector<256xf32>
    %42 = vector.multi_reduction <add>, %41, %cst_20 [0] : vector<8x256xf32> to vector<256xf32>
    %43 = vector.shape_cast %42 : vector<256xf32> to vector<1x256xf32>
    %cst_21 = arith.constant 1.250000e-01 : f32
    %44 = vector.broadcast %cst_21 : f32 to vector<1x256xf32>
    %45 = arith.mulf %40, %44 : vector<1x256xf32>
    %cst_22 = arith.constant 1.250000e-01 : f32
    %46 = vector.broadcast %cst_22 : f32 to vector<1x256xf32>
    %47 = arith.mulf %43, %46 : vector<1x256xf32>
    %48 = arith.mulf %45, %45 : vector<1x256xf32>
    %49 = arith.subf %47, %48 : vector<1x256xf32>
    %cst_23 = arith.constant 0.000000e+00 : f32
    %50 = vector.broadcast %cst_23 : f32 to vector<1x256xf32>
    %51 = arith.maximumf %49, %50 : vector<1x256xf32>
    %52 = vector.broadcast %45 : vector<1x256xf32> to vector<8x256xf32>
    %53 = arith.subf %36, %52 : vector<8x256xf32>
    %cst_24 = arith.constant 9.99999974E-6 : f32
    %54 = vector.broadcast %cst_24 : f32 to vector<1x256xf32>
    %55 = arith.addf %51, %54 : vector<1x256xf32>
    %56 = math.rsqrt %55 : vector<1x256xf32>
    %57 = vector.broadcast %56 : vector<1x256xf32> to vector<8x256xf32>
    %58 = arith.mulf %53, %57 : vector<8x256xf32>
    %59 = vector.broadcast %37 : vector<1x256xf32> to vector<8x256xf32>
    %60 = arith.mulf %58, %59 : vector<8x256xf32>
    %61 = vector.broadcast %38 : vector<1x256xf32> to vector<8x256xf32>
    %62 = arith.addf %60, %61 : vector<8x256xf32>
    %cst_25 = arith.constant 0.000000e+00 : f32
    %63 = vector.broadcast %cst_25 : f32 to vector<8x256xf32>
    %64 = arith.cmpf ogt, %62, %63 : vector<8x256xf32>
    %cst_26 = arith.constant 2.000000e-01 : f32
    %65 = vector.broadcast %cst_26 : f32 to vector<8x256xf32>
    %66 = arith.mulf %65, %62 : vector<8x256xf32>
    %67 = arith.select %64, %62, %66 : vector<8x256xi1>, vector<8x256xf32>
    %68 = arith.truncf %67 : vector<8x256xf32> to vector<8x256xbf16>
    %c0_27 = arith.constant 0 : index
    %c0_28 = arith.constant 0 : index
    %69 = vector.load %arg3[%c0_27, %c0_28] : memref<256x256xbf16, #tpu.memory_space<vmem>>, vector<256x256xbf16>
    %cst_29 = arith.constant dense<0.000000e+00> : vector<8x256xf32>
    %70 = tpu.matmul %68, %69, %cst_29 {dimension_numbers = #tpu.dot_dimension_numbers<[1], [0], [0], [1], [0, 0, 1, 1], [], []>} : vector<8x256xbf16>, vector<256x256xbf16>, vector<8x256xf32> -> vector<8x256xf32>
    %c4 = arith.constant 4 : index
    %c0_30 = arith.constant 0 : index
    %71 = vector.load %arg5[%c4, %c0_30] : memref<8x256xf32, #tpu.memory_space<vmem>>, vector<1x256xf32>
    %c5 = arith.constant 5 : index
    %c0_31 = arith.constant 0 : index
    %72 = vector.load %arg5[%c5, %c0_31] : memref<8x256xf32, #tpu.memory_space<vmem>>, vector<1x256xf32>
    %cst_32 = arith.constant dense<0.000000e+00> : vector<256xf32>
    %73 = vector.multi_reduction <add>, %70, %cst_32 [0] : vector<8x256xf32> to vector<256xf32>
    %74 = vector.shape_cast %73 : vector<256xf32> to vector<1x256xf32>
    %75 = arith.mulf %70, %70 : vector<8x256xf32>
    %cst_33 = arith.constant dense<0.000000e+00> : vector<256xf32>
    %76 = vector.multi_reduction <add>, %75, %cst_33 [0] : vector<8x256xf32> to vector<256xf32>
    %77 = vector.shape_cast %76 : vector<256xf32> to vector<1x256xf32>
    %cst_34 = arith.constant 1.250000e-01 : f32
    %78 = vector.broadcast %cst_34 : f32 to vector<1x256xf32>
    %79 = arith.mulf %74, %78 : vector<1x256xf32>
    %cst_35 = arith.constant 1.250000e-01 : f32
    %80 = vector.broadcast %cst_35 : f32 to vector<1x256xf32>
    %81 = arith.mulf %77, %80 : vector<1x256xf32>
    %82 = arith.mulf %79, %79 : vector<1x256xf32>
    %83 = arith.subf %81, %82 : vector<1x256xf32>
    %cst_36 = arith.constant 0.000000e+00 : f32
    %84 = vector.broadcast %cst_36 : f32 to vector<1x256xf32>
    %85 = arith.maximumf %83, %84 : vector<1x256xf32>
    %86 = vector.broadcast %79 : vector<1x256xf32> to vector<8x256xf32>
    %87 = arith.subf %70, %86 : vector<8x256xf32>
    %cst_37 = arith.constant 9.99999974E-6 : f32
    %88 = vector.broadcast %cst_37 : f32 to vector<1x256xf32>
    %89 = arith.addf %85, %88 : vector<1x256xf32>
    %90 = math.rsqrt %89 : vector<1x256xf32>
    %91 = vector.broadcast %90 : vector<1x256xf32> to vector<8x256xf32>
    %92 = arith.mulf %87, %91 : vector<8x256xf32>
    %93 = vector.broadcast %71 : vector<1x256xf32> to vector<8x256xf32>
    %94 = arith.mulf %92, %93 : vector<8x256xf32>
    %95 = vector.broadcast %72 : vector<1x256xf32> to vector<8x256xf32>
    %96 = arith.addf %94, %95 : vector<8x256xf32>
    %cst_38 = arith.constant 0.000000e+00 : f32
    %97 = vector.broadcast %cst_38 : f32 to vector<8x256xf32>
    %98 = arith.cmpf ogt, %96, %97 : vector<8x256xf32>
    %cst_39 = arith.constant 2.000000e-01 : f32
    %99 = vector.broadcast %cst_39 : f32 to vector<8x256xf32>
    %100 = arith.mulf %99, %96 : vector<8x256xf32>
    %101 = arith.select %98, %96, %100 : vector<8x256xi1>, vector<8x256xf32>
    %102 = arith.truncf %101 : vector<8x256xf32> to vector<8x256xbf16>
    %c0_40 = arith.constant 0 : index
    %c0_41 = arith.constant 0 : index
    %103 = vector.load %arg4[%c0_40, %c0_41] : memref<256x256xbf16, #tpu.memory_space<vmem>>, vector<256x256xbf16>
    %cst_42 = arith.constant dense<0.000000e+00> : vector<8x256xf32>
    %104 = tpu.matmul %102, %103, %cst_42 {dimension_numbers = #tpu.dot_dimension_numbers<[1], [0], [0], [1], [0, 0, 1, 1], [], []>} : vector<8x256xbf16>, vector<256x256xbf16>, vector<8x256xf32> -> vector<8x256xf32>
    %c6 = arith.constant 6 : index
    %c0_43 = arith.constant 0 : index
    %105 = vector.load %arg5[%c6, %c0_43] : memref<8x256xf32, #tpu.memory_space<vmem>>, vector<1x256xf32>
    %c7 = arith.constant 7 : index
    %c0_44 = arith.constant 0 : index
    %106 = vector.load %arg5[%c7, %c0_44] : memref<8x256xf32, #tpu.memory_space<vmem>>, vector<1x256xf32>
    %cst_45 = arith.constant dense<0.000000e+00> : vector<256xf32>
    %107 = vector.multi_reduction <add>, %104, %cst_45 [0] : vector<8x256xf32> to vector<256xf32>
    %108 = vector.shape_cast %107 : vector<256xf32> to vector<1x256xf32>
    %109 = arith.mulf %104, %104 : vector<8x256xf32>
    %cst_46 = arith.constant dense<0.000000e+00> : vector<256xf32>
    %110 = vector.multi_reduction <add>, %109, %cst_46 [0] : vector<8x256xf32> to vector<256xf32>
    %111 = vector.shape_cast %110 : vector<256xf32> to vector<1x256xf32>
    %cst_47 = arith.constant 1.250000e-01 : f32
    %112 = vector.broadcast %cst_47 : f32 to vector<1x256xf32>
    %113 = arith.mulf %108, %112 : vector<1x256xf32>
    %cst_48 = arith.constant 1.250000e-01 : f32
    %114 = vector.broadcast %cst_48 : f32 to vector<1x256xf32>
    %115 = arith.mulf %111, %114 : vector<1x256xf32>
    %116 = arith.mulf %113, %113 : vector<1x256xf32>
    %117 = arith.subf %115, %116 : vector<1x256xf32>
    %cst_49 = arith.constant 0.000000e+00 : f32
    %118 = vector.broadcast %cst_49 : f32 to vector<1x256xf32>
    %119 = arith.maximumf %117, %118 : vector<1x256xf32>
    %120 = vector.broadcast %113 : vector<1x256xf32> to vector<8x256xf32>
    %121 = arith.subf %104, %120 : vector<8x256xf32>
    %cst_50 = arith.constant 9.99999974E-6 : f32
    %122 = vector.broadcast %cst_50 : f32 to vector<1x256xf32>
    %123 = arith.addf %119, %122 : vector<1x256xf32>
    %124 = math.rsqrt %123 : vector<1x256xf32>
    %125 = vector.broadcast %124 : vector<1x256xf32> to vector<8x256xf32>
    %126 = arith.mulf %121, %125 : vector<8x256xf32>
    %127 = vector.broadcast %105 : vector<1x256xf32> to vector<8x256xf32>
    %128 = arith.mulf %126, %127 : vector<8x256xf32>
    %129 = vector.broadcast %106 : vector<1x256xf32> to vector<8x256xf32>
    %130 = arith.addf %128, %129 : vector<8x256xf32>
    %cst_51 = arith.constant 0.000000e+00 : f32
    %131 = vector.broadcast %cst_51 : f32 to vector<8x256xf32>
    %132 = arith.cmpf ogt, %130, %131 : vector<8x256xf32>
    %cst_52 = arith.constant 2.000000e-01 : f32
    %133 = vector.broadcast %cst_52 : f32 to vector<8x256xf32>
    %134 = arith.mulf %133, %130 : vector<8x256xf32>
    %135 = arith.select %132, %130, %134 : vector<8x256xi1>, vector<8x256xf32>
    tpu.wait_dma2 semaphore(%arg10 : memref<!tpu.dma_semaphore, #tpu.memory_space<semaphore_mem>>) src(%arg7 : memref<256x784xbf16, #tpu.memory_space<any>>) dst(%arg9 : memref<256x784xbf16, #tpu.memory_space<vmem>>)
    %136 = arith.truncf %135 : vector<8x256xf32> to vector<8x256xbf16>
    %c0_53 = arith.constant 0 : index
    %c0_54 = arith.constant 0 : index
    %137 = vector.load %arg9[%c0_53, %c0_54] : memref<256x784xbf16, #tpu.memory_space<vmem>>, vector<256x784xbf16>
    %cst_55 = arith.constant dense<0.000000e+00> : vector<8x784xf32>
    %138 = tpu.matmul %136, %137, %cst_55 {dimension_numbers = #tpu.dot_dimension_numbers<[1], [0], [0], [1], [0, 0, 1, 1], [], []>} : vector<8x256xbf16>, vector<256x784xbf16>, vector<8x784xf32> -> vector<8x784xf32>
    %c0_56 = arith.constant 0 : index
    %c0_57 = arith.constant 0 : index
    %139 = vector.load %arg6[%c0_56, %c0_57] : memref<1x784xf32, #tpu.memory_space<vmem>>, vector<1x784xf32>
    %140 = vector.broadcast %139 : vector<1x784xf32> to vector<8x784xf32>
    %141 = arith.addf %138, %140 : vector<8x784xf32>
    %142 = math.tanh %141 : vector<8x784xf32>
    %143 = arith.truncf %142 : vector<8x784xf32> to vector<8x784xbf16>
    %c0_58 = arith.constant 0 : index
    %c0_59 = arith.constant 0 : index
    %144 = vector.load %arg8[%c0_58, %c0_59] : memref<8x784xbf16, #tpu.memory_space<vmem>>, vector<8x784xbf16>
    tpu.vector_store %arg8[%c0_58, %c0_59], %143 {strides = array<i32>} : memref<8x784xbf16, #tpu.memory_space<vmem>>, vector<8x784xbf16>,
    return
  }
}

</mosaic_0001>

<llo_original>
// kernel: tpu_custom_call.1
$region0: #{tpu_custom_call.1}
  #allocation0 [shape = 'u32[]', space=smem, size = 0x4, offset = 0x4, fixed_abs, tag = 'smem constant byte address 0x4 - core index']
  #allocation1 [shape = 'u32[144,128]{1,0:T(1,128)}', space=vmem, size = 0x12000, scoped, tag = 'internal scratch']
  #allocation2 [shape = 'bf16[256,784]{1,0:T(16,128)(2,1)}', space=vmem, size = 0x70000, scoped, tag = 'scratch operand']
  #allocation3 [shape = 's32[1]{0}', space=sflag, size = 0x4, scoped, tag = 'scratch operand']
  #allocation6 [shape = 's32[]', space=sflag, size = 0x4, offset = 0, fixed_abs, tag = 'sflag constant byte address 0x0 - dummy sync flag']
  %s0 = inlined_call_operand.vmem [shape: bf16[8,64], index: 0, kind: input, shape index: {}]
  %s1 = inlined_call_operand.vmem [shape: bf16[64,128], index: 1, kind: input, shape index: {}]
  %s2 = inlined_call_operand.vmem [shape: bf16[128,256], index: 2, kind: input, shape index: {}]
  %s3 = inlined_call_operand.vmem [shape: bf16[256,256], index: 3, kind: input, shape index: {}]
  %s4 = inlined_call_operand.vmem [shape: bf16[256,256], index: 4, kind: input, shape index: {}]
  %s5 = inlined_call_operand.vmem [shape: f32[8,256], index: 5, kind: input, shape index: {}]
  %s6 = inlined_call_operand.vmem [shape: f32[1,784], index: 6, kind: input, shape index: {}]
  %s7 = inlined_call_operand.vmem [shape: bf16[256,784], index: 7, kind: input, shape index: {}]
  %s8 = inlined_call_operand.hbm [shape: bf16[8,784], index: 8, kind: output, shape index: {}]
  %s9 = sld [smem:[#allocation0]]
  $region75: #{tpu_custom_call.1} parent=0
    _
  %s11 = ssub.s32 1, %s9
  %s12 = scalar_select 0, %s11, %s9
  $region1: #{tpu_custom_call.1} parent=0
    #allocation4 [shape = 'u8[14336]{0}', space=vmem, size = 0x3800, scoped, tag = 'output window, operand 0, single buffered']
    #allocation5 [shape = 's32[1]{0}', space=sflag, size = 0x4, scoped, tag = 'scoped memory for tpu_custom_call.1']
    %13 = vsyncpa [#allocation5], 0
    // Predicated region
    $region2: #{tpu_custom_call.1} parent=1 // pred_check
      _
    $region3: #{tpu_custom_call.1} parent=1 // pred_check_branch
      %15 = sbr.rel (0) target = $region5
    $region4: #{tpu_custom_call.1} parent=1 // pred_region
      _
    $region5: #{tpu_custom_call.1} parent=1 // pred_fallthru
      _
    // Predicated region
    $region6: #{tpu_custom_call.1} parent=1 // pred_check
      _
    $region7: #{tpu_custom_call.1} parent=1 // pred_check_branch
      %17 = sbr.rel (0) target = $region9
    $region8: #{tpu_custom_call.1} parent=1 // pred_region
      _
    $region9: #{tpu_custom_call.1} parent=1 // pred_fallthru
      _
    // Predicated region
    $region10: #{tpu_custom_call.1} parent=1 // pred_check
      _
    $region11: #{tpu_custom_call.1} parent=1 // pred_check_branch
      %19 = sbr.rel (0) target = $region13
    $region12: #{tpu_custom_call.1} parent=1 // pred_region
      _
    $region13: #{tpu_custom_call.1} parent=1 // pred_fallthru
      _
    // Predicated region
    $region14: #{tpu_custom_call.1} parent=1 // pred_check
      _
    $region15: #{tpu_custom_call.1} parent=1 // pred_check_branch
      %21 = sbr.rel (0) target = $region17
    $region16: #{tpu_custom_call.1} parent=1 // pred_region
      _
    $region17: #{tpu_custom_call.1} parent=1 // pred_fallthru
      _
    // Predicated region
    $region18: #{tpu_custom_call.1} parent=1 // pred_check
      _
    $region19: #{tpu_custom_call.1} parent=1 // pred_check_branch
      %23 = sbr.rel (0) target = $region21
    $region20: #{tpu_custom_call.1} parent=1 // pred_region
      _
    $region21: #{tpu_custom_call.1} parent=1 // pred_fallthru
      _
    // Predicated region
    $region22: #{tpu_custom_call.1} parent=1 // pred_check
      _
    $region23: #{tpu_custom_call.1} parent=1 // pred_check_branch
      %25 = sbr.rel (0) target = $region25
    $region24: #{tpu_custom_call.1} parent=1 // pred_region
      _
    $region25: #{tpu_custom_call.1} parent=1 // pred_fallthru
      _
    // Predicated region
    $region26: #{tpu_custom_call.1} parent=1 // pred_check
      _
    $region27: #{tpu_custom_call.1} parent=1 // pred_check_branch
      %27 = sbr.rel (0) target = $region29
    $region28: #{tpu_custom_call.1} parent=1 // pred_region
      _
    $region29: #{tpu_custom_call.1} parent=1 // pred_fallthru
      _
    %p30 = scmp.lt.u32.totalorder 4, 8
    %p31 = pneg %p30
    // Predicated region
    $region30: #{tpu_custom_call.1} parent=1 // pred_check
      _
    $region31: #{tpu_custom_call.1} parent=1 // pred_check_branch
      %33 = sbr.rel (%p30) target = $region33
    $region32: #{tpu_custom_call.1} parent=1 // pred_region
      %s494 = sand.u32 4, 7
      %p495 = scmp.eq.s32.totalorder %s494, 0
      %p496 = pneg %p495
      // Predicated region
      $region45: #{tpu_custom_call.1} parent=32 // pred_check
        _
      $region46: #{tpu_custom_call.1} parent=32 // pred_check_branch
        %498 = sbr.rel (%p495) target = $region48
      $region47: #{tpu_custom_call.1} parent=32 // pred_region
        %s499 = sand.u32 4, 7
        %s500 = ssub.s32 4, %s499
        %s501 = scalar_lea.vmem %s7, %s500
        %s502 = ssub.s32 4, %s499
        %s503 = scalar_lea.vmem [#allocation2], %s502
        loop: start=0, step=1, limit=1
        $region49: #{tpu_custom_call.1} parent=47 // loop_pre_header
          _
        $region50: #{tpu_custom_call.1} parent=47 // loop_header
          %s505 = sphi 0, %s509
          %p506 = scmp.ge.s32.totalorder %s505, 1
          %s510 = sphi %s7, %s7
          %s511 = sphi [#allocation2], [#allocation2]
        $region51: #{tpu_custom_call.1} parent=47 // loop_header_branch
          %508 = sbr.rel (%p506) target = $region55
        $region52: #{tpu_custom_call.1} parent=47 // loop_body
          _
        $region53: #{tpu_custom_call.1} parent=47 // loop_footer
          %s509 = sadd.s32 1, %s505
        $region54: #{tpu_custom_call.1} parent=47 // loop_footer_branch
          %504 = sbr.rel target = $region50
        $region55: #{tpu_custom_call.1} parent=47 // loop_exit
          _
        %s512 = sshllo.u32 0, %s499
        loop: start=0, step=1, limit=1
        $region56: #{tpu_custom_call.1} parent=47 // loop_pre_header
          _
        $region57: #{tpu_custom_call.1} parent=47 // loop_header
          %s514 = sphi 0, %s518
          %p515 = scmp.ge.s32.totalorder %s514, 1
          %s519 = sphi %s501, %s501
          %s520 = sphi %s503, %s503
        $region58: #{tpu_custom_call.1} parent=47 // loop_header_branch
          %517 = sbr.rel (%p515) target = $region62
        $region59: #{tpu_custom_call.1} parent=47 // loop_body
          %v521 = vld [vmem:[%s519] sm:%s512]
          %522 = vst [vmem:[%s520] sm:%s512] %v521
          %v523 = vld [vmem:[%s519 + $0x1c] sm:%s512]
          %524 = vst [vmem:[%s520 + $0x4] sm:%s512] %v523
          %v525 = vld [vmem:[%s519 + $0x4] sm:%s512]
          %526 = vst [vmem:[%s520 + $0x8] sm:%s512] %v525
          %v527 = vld [vmem:[%s519 + $0x20] sm:%s512]
          %528 = vst [vmem:[%s520 + $0xc] sm:%s512] %v527
          %v529 = vld [vmem:[%s519 + $0x8] sm:%s512]
          %530 = vst [vmem:[%s520 + $0x10] sm:%s512] %v529
          %v531 = vld [vmem:[%s519 + $0x24] sm:%s512]
          %532 = vst [vmem:[%s520 + $0x14] sm:%s512] %v531
          %v533 = vld [vmem:[%s519 + $0xc] sm:%s512]
          %534 = vst [vmem:[%s520 + $0x18] sm:%s512] %v533
          %v535 = vld [vmem:[%s519 + $0x28] sm:%s512]
          %536 = vst [vmem:[%s520 + $0x1c] sm:%s512] %v535
          %v537 = vld [vmem:[%s519 + $0x10] sm:%s512]
          %538 = vst [vmem:[%s520 + $0x20] sm:%s512] %v537
          %v539 = vld [vmem:[%s519 + $0x2c] sm:%s512]
          %540 = vst [vmem:[%s520 + $0x24] sm:%s512] %v539
          %v541 = vld [vmem:[%s519 + $0x14] sm:%s512]
          %542 = vst [vmem:[%s520 + $0x28] sm:%s512] %v541
          %v543 = vld [vmem:[%s519 + $0x30] sm:%s512]
          %544 = vst [vmem:[%s520 + $0x2c] sm:%s512] %v543
          %v545 = vld [vmem:[%s519 + $0x18] sm:%s512]
          %546 = vst [vmem:[%s520 + $0x30] sm:%s512] %v545
          %v547 = vld [vmem:[%s519 + $0x34] sm:%s512]
          %548 = vst [vmem:[%s520 + $0x34] sm:%s512] %v547
          %v549 = vld [vmem:[%s519 + $0x38] sm:%s512]
          %550 = vst [vmem:[%s520 + $0x38] sm:%s512] %v549
          %v551 = vld [vmem:[%s519 + $0x54] sm:%s512]
          %552 = vst [vmem:[%s520 + $0x3c] sm:%s512] %v551
          %v553 = vld [vmem:[%s519 + $0x3c] sm:%s512]
          %554 = vst [vmem:[%s520 + $0x40] sm:%s512] %v553
          %v555 = vld [vmem:[%s519 + $0x58] sm:%s512]
          %556 = vst [vmem:[%s520 + $0x44] sm:%s512] %v555
          %v557 = vld [vmem:[%s519 + $0x40] sm:%s512]
          %558 = vst [vmem:[%s520 + $0x48] sm:%s512] %v557
          %v559 = vld [vmem:[%s519 + $0x5c] sm:%s512]
          %560 = vst [vmem:[%s520 + $0x4c] sm:%s512] %v559
          %v561 = vld [vmem:[%s519 + $0x44] sm:%s512]
          %562 = vst [vmem:[%s520 + $0x50] sm:%s512] %v561
          %v563 = vld [vmem:[%s519 + $0x60] sm:%s512]
          %564 = vst [vmem:[%s520 + $0x54] sm:%s512] %v563
          %v565 = vld [vmem:[%s519 + $0x48] sm:%s512]
          %566 = vst [vmem:[%s520 + $0x58] sm:%s512] %v565
          %v567 = vld [vmem:[%s519 + $0x64] sm:%s512]
          %568 = vst [vmem:[%s520 + $0x5c] sm:%s512] %v567
          %v569 = vld [vmem:[%s519 + $0x4c] sm:%s512]
          %570 = vst [vmem:[%s520 + $0x60] sm:%s512] %v569
          %v571 = vld [vmem:[%s519 + $0x68] sm:%s512]
          %572 = vst [vmem:[%s520 + $0x64] sm:%s512] %v571
          %v573 = vld [vmem:[%s519 + $0x50] sm:%s512]
          %574 = vst [vmem:[%s520 + $0x68] sm:%s512] %v573
          %v575 = vld [vmem:[%s519 + $0x6c] sm:%s512]
          %576 = vst [vmem:[%s520 + $0x6c] sm:%s512] %v575
          %v577 = vld [vmem:[%s519 + $0x70] sm:%s512]
          %578 = vst [vmem:[%s520 + $0x70] sm:%s512] %v577
          %v579 = vld [vmem:[%s519 + $0x8c] sm:%s512]
          %580 = vst [vmem:[%s520 + $0x74] sm:%s512] %v579
          %v581 = vld [vmem:[%s519 + $0x74] sm:%s512]
          %582 = vst [vmem:[%s520 + $0x78] sm:%s512] %v581
          %v583 = vld [vmem:[%s519 + $0x90] sm:%s512]
          %584 = vst [vmem:[%s520 + $0x7c] sm:%s512] %v583
          %v585 = vld [vmem:[%s519 + $0x78] sm:%s512]
          %586 = vst [vmem:[%s520 + $0x80] sm:%s512] %v585
          %v587 = vld [vmem:[%s519 + $0x94] sm:%s512]
          %588 = vst [vmem:[%s520 + $0x84] sm:%s512] %v587
          %v589 = vld [vmem:[%s519 + $0x7c] sm:%s512]
          %590 = vst [vmem:[%s520 + $0x88] sm:%s512] %v589
          %v591 = vld [vmem:[%s519 + $0x98] sm:%s512]
          %592 = vst [vmem:[%s520 + $0x8c] sm:%s512] %v591
          %v593 = vld [vmem:[%s519 + $0x80] sm:%s512]
          %594 = vst [vmem:[%s520 + $0x90] sm:%s512] %v593
          %v595 = vld [vmem:[%s519 + $0x9c] sm:%s512]
          %596 = vst [vmem:[%s520 + $0x94] sm:%s512] %v595
          %v597 = vld [vmem:[%s519 + $0x84] sm:%s512]
          %598 = vst [vmem:[%s520 + $0x98] sm:%s512] %v597
          %v599 = vld [vmem:[%s519 + $0xa0] sm:%s512]
          %600 = vst [vmem:[%s520 + $0x9c] sm:%s512] %v599
          %v601 = vld [vmem:[%s519 + $0x88] sm:%s512]
          %602 = vst [vmem:[%s520 + $0xa0] sm:%s512] %v601
          %v603 = vld [vmem:[%s519 + $0xa4] sm:%s512]
          %604 = vst [vmem:[%s520 + $0xa4] sm:%s512] %v603
          %v605 = vld [vmem:[%s519 + $0xa8] sm:%s512]
          %606 = vst [vmem:[%s520 + $0xa8] sm:%s512] %v605
          %v607 = vld [vmem:[%s519 + $0xc4] sm:%s512]
          %608 = vst [vmem:[%s520 + $0xac] sm:%s512] %v607
          %v609 = vld [vmem:[%s519 + $0xac] sm:%s512]
          %610 = vst [vmem:[%s520 + $0xb0] sm:%s512] %v609
          %v611 = vld [vmem:[%s519 + $0xc8] sm:%s512]
          %612 = vst [vmem:[%s520 + $0xb4] sm:%s512] %v611
          %v613 = vld [vmem:[%s519 + $0xb0] sm:%s512]
          %614 = vst [vmem:[%s520 + $0xb8] sm:%s512] %v613
          %v615 = vld [vmem:[%s519 + $0xcc] sm:%s512]
          %616 = vst [vmem:[%s520 + $0xbc] sm:%s512] %v615
          %v617 = vld [vmem:[%s519 + $0xb4] sm:%s512]
          %618 = vst [vmem:[%s520 + $0xc0] sm:%s512] %v617
          %v619 = vld [vmem:[%s519 + $0xd0] sm:%s512]
          %620 = vst [vmem:[%s520 + $0xc4] sm:%s512] %v619
          %v621 = vld [vmem:[%s519 + $0xb8] sm:%s512]
          %622 = vst [vmem:[%s520 + $0xc8] sm:%s512] %v621
          %v623 = vld [vmem:[%s519 + $0xd4] sm:%s512]
          %624 = vst [vmem:[%s520 + $0xcc] sm:%s512] %v623
          %v625 = vld [vmem:[%s519 + $0xbc] sm:%s512]
          %626 = vst [vmem:[%s520 + $0xd0] sm:%s512] %v625
          %v627 = vld [vmem:[%s519 + $0xd8] sm:%s512]
          %628 = vst [vmem:[%s520 + $0xd4] sm:%s512] %v627
          %v629 = vld [vmem:[%s519 + $0xc0] sm:%s512]
          %630 = vst [vmem:[%s520 + $0xd8] sm:%s512] %v629
          %v631 = vld [vmem:[%s519 + $0xdc] sm:%s512]
          %632 = vst [vmem:[%s520 + $0xdc] sm:%s512] %v631
          %v633 = vld [vmem:[%s519 + $0xe0] sm:%s512]
          %634 = vst [vmem:[%s520 + $0xe0] sm:%s512] %v633
          %v635 = vld [vmem:[%s519 + $0xfc] sm:%s512]
          %636 = vst [vmem:[%s520 + $0xe4] sm:%s512] %v635
          %v637 = vld [vmem:[%s519 + $0xe4] sm:%s512]
          %638 = vst [vmem:[%s520 + $0xe8] sm:%s512] %v637
          %v639 = vld [vmem:[%s519 + $0x100] sm:%s512]
          %640 = vst [vmem:[%s520 + $0xec] sm:%s512] %v639
          %v641 = vld [vmem:[%s519 + $0xe8] sm:%s512]
          %642 = vst [vmem:[%s520 + $0xf0] sm:%s512] %v641
          %v643 = vld [vmem:[%s519 + $0x104] sm:%s512]
          %644 = vst [vmem:[%s520 + $0xf4] sm:%s512] %v643
          %v645 = vld [vmem:[%s519 + $0xec] sm:%s512]
          %646 = vst [vmem:[%s520 + $0xf8] sm:%s512] %v645
          %v647 = vld [vmem:[%s519 + $0x108] sm:%s512]
          %648 = vst [vmem:[%s520 + $0xfc] sm:%s512] %v647
          %v649 = vld [vmem:[%s519 + $0xf0] sm:%s512]
          %650 = vst [vmem:[%s520 + $0x100] sm:%s512] %v649
          %v651 = vld [vmem:[%s519 + $0x10c] sm:%s512]
          %652 = vst [vmem:[%s520 + $0x104] sm:%s512] %v651
          %v653 = vld [vmem:[%s519 + $0xf4] sm:%s512]
          %654 = vst [vmem:[%s520 + $0x108] sm:%s512] %v653
          %v655 = vld [vmem:[%s519 + $0x110] sm:%s512]
          %656 = vst [vmem:[%s520 + $0x10c] sm:%s512] %v655
          %v657 = vld [vmem:[%s519 + $0xf8] sm:%s512]
          %658 = vst [vmem:[%s520 + $0x110] sm:%s512] %v657
          %v659 = vld [vmem:[%s519 + $0x114] sm:%s512]
          %660 = vst [vmem:[%s520 + $0x114] sm:%s512] %v659
          %v661 = vld [vmem:[%s519 + $0x118] sm:%s512]
          %662 = vst [vmem:[%s520 + $0x118] sm:%s512] %v661
          %v663 = vld [vmem:[%s519 + $0x134] sm:%s512]
          %664 = vst [vmem:[%s520 + $0x11c] sm:%s512] %v663
          %v665 = vld [vmem:[%s519 + $0x11c] sm:%s512]
          %666 = vst [vmem:[%s520 + $0x120] sm:%s512] %v665
          %v667 = vld [vmem:[%s519 + $0x138] sm:%s512]
          %668 = vst [vmem:[%s520 + $0x124] sm:%s512] %v667
          %v669 = vld [vmem:[%s519 + $0x120] sm:%s512]
          %670 = vst [vmem:[%s520 + $0x128] sm:%s512] %v669
          %v671 = vld [vmem:[%s519 + $0x13c] sm:%s512]
          %672 = vst [vmem:[%s520 + $0x12c] sm:%s512] %v671
          %v673 = vld [vmem:[%s519 + $0x124] sm:%s512]
          %674 = vst [vmem:[%s520 + $0x130] sm:%s512] %v673
          %v675 = vld [vmem:[%s519 + $0x140] sm:%s512]
          %676 = vst [vmem:[%s520 + $0x134] sm:%s512] %v675
          %v677 = vld [vmem:[%s519 + $0x128] sm:%s512]
          %678 = vst [vmem:[%s520 + $0x138] sm:%s512] %v677
          %v679 = vld [vmem:[%s519 + $0x144] sm:%s512]
          %680 = vst [vmem:[%s520 + $0x13c] sm:%s512] %v679
          %v681 = vld [vmem:[%s519 + $0x12c] sm:%s512]
          %682 = vst [vmem:[%s520 + $0x140] sm:%s512] %v681
          %v683 = vld [vmem:[%s519 + $0x148] sm:%s512]
          %684 = vst [vmem:[%s520 + $0x144] sm:%s512] %v683
          %v685 = vld [vmem:[%s519 + $0x130] sm:%s512]
          %686 = vst [vmem:[%s520 + $0x148] sm:%s512] %v685
          %v687 = vld [vmem:[%s519 + $0x14c] sm:%s512]
          %688 = vst [vmem:[%s520 + $0x14c] sm:%s512] %v687
          %v689 = vld [vmem:[%s519 + $0x150] sm:%s512]
          %690 = vst [vmem:[%s520 + $0x150] sm:%s512] %v689
          %v691 = vld [vmem:[%s519 + $0x16c] sm:%s512]
          %692 = vst [vmem:[%s520 + $0x154] sm:%s512] %v691
          %v693 = vld [vmem:[%s519 + $0x154] sm:%s512]
          %694 = vst [vmem:[%s520 + $0x158] sm:%s512] %v693
          %v695 = vld [vmem:[%s519 + $0x170] sm:%s512]
          %696 = vst [vmem:[%s520 + $0x15c] sm:%s512] %v695
          %v697 = vld [vmem:[%s519 + $0x158] sm:%s512]
          %698 = vst [vmem:[%s520 + $0x160] sm:%s512] %v697
          %v699 = vld [vmem:[%s519 + $0x174] sm:%s512]
          %700 = vst [vmem:[%s520 + $0x164] sm:%s512] %v699
          %v701 = vld [vmem:[%s519 + $0x15c] sm:%s512]
          %702 = vst [vmem:[%s520 + $0x168] sm:%s512] %v701
          %v703 = vld [vmem:[%s519 + $0x178] sm:%s512]
          %704 = vst [vmem:[%s520 + $0x16c] sm:%s512] %v703
          %v705 = vld [vmem:[%s519 + $0x160] sm:%s512]
          %706 = vst [vmem:[%s520 + $0x170] sm:%s512] %v705
          %v707 = vld [vmem:[%s519 + $0x17c] sm:%s512]
          %708 = vst [vmem:[%s520 + $0x174] sm:%s512] %v707
          %v709 = vld [vmem:[%s519 + $0x164] sm:%s512]
          %710 = vst [vmem:[%s520 + $0x178] sm:%s512] %v709
          %v711 = vld [vmem:[%s519 + $0x180] sm:%s512]
          %712 = vst [vmem:[%s520 + $0x17c] sm:%s512] %v711
          %v713 = vld [vmem:[%s519 + $0x168] sm:%s512]
          %714 = vst [vmem:[%s520 + $0x180] sm:%s512] %v713
          %v715 = vld [vmem:[%s519 + $0x184] sm:%s512]
          %716 = vst [vmem:[%s520 + $0x184] sm:%s512] %v715
          %v717 = vld [vmem:[%s519 + $0x188] sm:%s512]
          %718 = vst [vmem:[%s520 + $0x188] sm:%s512] %v717
          %v719 = vld [vmem:[%s519 + $0x1a4] sm:%s512]
          %720 = vst [vmem:[%s520 + $0x18c] sm:%s512] %v719
          %v721 = vld [vmem:[%s519 + $0x18c] sm:%s512]
          %722 = vst [vmem:[%s520 + $0x190] sm:%s512] %v721
          %v723 = vld [vmem:[%s519 + $0x1a8] sm:%s512]
          %724 = vst [vmem:[%s520 + $0x194] sm:%s512] %v723
          %v725 = vld [vmem:[%s519 + $0x190] sm:%s512]
          %726 = vst [vmem:[%s520 + $0x198] sm:%s512] %v725
          %v727 = vld [vmem:[%s519 + $0x1ac] sm:%s512]
          %728 = vst [vmem:[%s520 + $0x19c] sm:%s512] %v727
          %v729 = vld [vmem:[%s519 + $0x194] sm:%s512]
          %730 = vst [vmem:[%s520 + $0x1a0] sm:%s512] %v729
          %v731 = vld [vmem:[%s519 + $0x1b0] sm:%s512]
          %732 = vst [vmem:[%s520 + $0x1a4] sm:%s512] %v731
          %v733 = vld [vmem:[%s519 + $0x198] sm:%s512]
          %734 = vst [vmem:[%s520 + $0x1a8] sm:%s512] %v733
          %v735 = vld [vmem:[%s519 + $0x1b4] sm:%s512]
          %736 = vst [vmem:[%s520 + $0x1ac] sm:%s512] %v735
          %v737 = vld [vmem:[%s519 + $0x19c] sm:%s512]
          %738 = vst [vmem:[%s520 + $0x1b0] sm:%s512] %v737
          %v739 = vld [vmem:[%s519 + $0x1b8] sm:%s512]
          %740 = vst [vmem:[%s520 + $0x1b4] sm:%s512] %v739
          %v741 = vld [vmem:[%s519 + $0x1a0] sm:%s512]
          %742 = vst [vmem:[%s520 + $0x1b8] sm:%s512] %v741
          %v743 = vld [vmem:[%s519 + $0x1bc] sm:%s512]
          %744 = vst [vmem:[%s520 + $0x1bc] sm:%s512] %v743
          %v745 = vld [vmem:[%s519 + $0x1c0] sm:%s512]
          %746 = vst [vmem:[%s520 + $0x1c0] sm:%s512] %v745
          %v747 = vld [vmem:[%s519 + $0x1dc] sm:%s512]
          %748 = vst [vmem:[%s520 + $0x1c4] sm:%s512] %v747
          %v749 = vld [vmem:[%s519 + $0x1c4] sm:%s512]
          %750 = vst [vmem:[%s520 + $0x1c8] sm:%s512] %v749
          %v751 = vld [vmem:[%s519 + $0x1e0] sm:%s512]
          %752 = vst [vmem:[%s520 + $0x1cc] sm:%s512] %v751
          %v753 = vld [vmem:[%s519 + $0x1c8] sm:%s512]
          %754 = vst [vmem:[%s520 + $0x1d0] sm:%s512] %v753
          %v755 = vld [vmem:[%s519 + $0x1e4] sm:%s512]
          %756 = vst [vmem:[%s520 + $0x1d4] sm:%s512] %v755
          %v757 = vld [vmem:[%s519 + $0x1cc] sm:%s512]
          %758 = vst [vmem:[%s520 + $0x1d8] sm:%s512] %v757
          %v759 = vld [vmem:[%s519 + $0x1e8] sm:%s512]
          %760 = vst [vmem:[%s520 + $0x1dc] sm:%s512] %v759
          %v761 = vld [vmem:[%s519 + $0x1d0] sm:%s512]
          %762 = vst [vmem:[%s520 + $0x1e0] sm:%s512] %v761
          %v763 = vld [vmem:[%s519 + $0x1ec] sm:%s512]
          %764 = vst [vmem:[%s520 + $0x1e4] sm:%s512] %v763
          %v765 = vld [vmem:[%s519 + $0x1d4] sm:%s512]
          %766 = vst [vmem:[%s520 + $0x1e8] sm:%s512] %v765
          %v767 = vld [vmem:[%s519 + $0x1f0] sm:%s512]
          %768 = vst [vmem:[%s520 + $0x1ec] sm:%s512] %v767
          %v769 = vld [vmem:[%s519 + $0x1d8] sm:%s512]
          %770 = vst [vmem:[%s520 + $0x1f0] sm:%s512] %v769
          %v771 = vld [vmem:[%s519 + $0x1f4] sm:%s512]
          %772 = vst [vmem:[%s520 + $0x1f4] sm:%s512] %v771
          %v773 = vld [vmem:[%s519 + $0x1f8] sm:%s512]
          %774 = vst [vmem:[%s520 + $0x1f8] sm:%s512] %v773
          %v775 = vld [vmem:[%s519 + $0x214] sm:%s512]
          %776 = vst [vmem:[%s520 + $0x1fc] sm:%s512] %v775
          %v777 = vld [vmem:[%s519 + $0x1fc] sm:%s512]
          %778 = vst [vmem:[%s520 + $0x200] sm:%s512] %v777
          %v779 = vld [vmem:[%s519 + $0x218] sm:%s512]
          %780 = vst [vmem:[%s520 + $0x204] sm:%s512] %v779
          %v781 = vld [vmem:[%s519 + $0x200] sm:%s512]
          %782 = vst [vmem:[%s520 + $0x208] sm:%s512] %v781
          %v783 = vld [vmem:[%s519 + $0x21c] sm:%s512]
          %784 = vst [vmem:[%s520 + $0x20c] sm:%s512] %v783
          %v785 = vld [vmem:[%s519 + $0x204] sm:%s512]
          %786 = vst [vmem:[%s520 + $0x210] sm:%s512] %v785
          %v787 = vld [vmem:[%s519 + $0x220] sm:%s512]
          %788 = vst [vmem:[%s520 + $0x214] sm:%s512] %v787
          %v789 = vld [vmem:[%s519 + $0x208] sm:%s512]
          %790 = vst [vmem:[%s520 + $0x218] sm:%s512] %v789
          %v791 = vld [vmem:[%s519 + $0x224] sm:%s512]
          %792 = vst [vmem:[%s520 + $0x21c] sm:%s512] %v791
          %v793 = vld [vmem:[%s519 + $0x20c] sm:%s512]
          %794 = vst [vmem:[%s520 + $0x220] sm:%s512] %v793
          %v795 = vld [vmem:[%s519 + $0x228] sm:%s512]
          %796 = vst [vmem:[%s520 + $0x224] sm:%s512] %v795
          %v797 = vld [vmem:[%s519 + $0x210] sm:%s512]
          %798 = vst [vmem:[%s520 + $0x228] sm:%s512] %v797
          %v799 = vld [vmem:[%s519 + $0x22c] sm:%s512]
          %800 = vst [vmem:[%s520 + $0x22c] sm:%s512] %v799
          %v801 = vld [vmem:[%s519 + $0x230] sm:%s512]
          %802 = vst [vmem:[%s520 + $0x230] sm:%s512] %v801
          %v803 = vld [vmem:[%s519 + $0x24c] sm:%s512]
          %804 = vst [vmem:[%s520 + $0x234] sm:%s512] %v803
          %v805 = vld [vmem:[%s519 + $0x234] sm:%s512]
          %806 = vst [vmem:[%s520 + $0x238] sm:%s512] %v805
          %v807 = vld [vmem:[%s519 + $0x250] sm:%s512]
          %808 = vst [vmem:[%s520 + $0x23c] sm:%s512] %v807
          %v809 = vld [vmem:[%s519 + $0x238] sm:%s512]
          %810 = vst [vmem:[%s520 + $0x240] sm:%s512] %v809
          %v811 = vld [vmem:[%s519 + $0x254] sm:%s512]
          %812 = vst [vmem:[%s520 + $0x244] sm:%s512] %v811
          %v813 = vld [vmem:[%s519 + $0x23c] sm:%s512]
          %814 = vst [vmem:[%s520 + $0x248] sm:%s512] %v813
          %v815 = vld [vmem:[%s519 + $0x258] sm:%s512]
          %816 = vst [vmem:[%s520 + $0x24c] sm:%s512] %v815
          %v817 = vld [vmem:[%s519 + $0x240] sm:%s512]
          %818 = vst [vmem:[%s520 + $0x250] sm:%s512] %v817
          %v819 = vld [vmem:[%s519 + $0x25c] sm:%s512]
          %820 = vst [vmem:[%s520 + $0x254] sm:%s512] %v819
          %v821 = vld [vmem:[%s519 + $0x244] sm:%s512]
          %822 = vst [vmem:[%s520 + $0x258] sm:%s512] %v821
          %v823 = vld [vmem:[%s519 + $0x260] sm:%s512]
          %824 = vst [vmem:[%s520 + $0x25c] sm:%s512] %v823
          %v825 = vld [vmem:[%s519 + $0x248] sm:%s512]
          %826 = vst [vmem:[%s520 + $0x260] sm:%s512] %v825
          %v827 = vld [vmem:[%s519 + $0x264] sm:%s512]
          %828 = vst [vmem:[%s520 + $0x264] sm:%s512] %v827
          %v829 = vld [vmem:[%s519 + $0x268] sm:%s512]
          %830 = vst [vmem:[%s520 + $0x268] sm:%s512] %v829
          %v831 = vld [vmem:[%s519 + $0x284] sm:%s512]
          %832 = vst [vmem:[%s520 + $0x26c] sm:%s512] %v831
          %v833 = vld [vmem:[%s519 + $0x26c] sm:%s512]
          %834 = vst [vmem:[%s520 + $0x270] sm:%s512] %v833
          %v835 = vld [vmem:[%s519 + $0x288] sm:%s512]
          %836 = vst [vmem:[%s520 + $0x274] sm:%s512] %v835
          %v837 = vld [vmem:[%s519 + $0x270] sm:%s512]
          %838 = vst [vmem:[%s520 + $0x278] sm:%s512] %v837
          %v839 = vld [vmem:[%s519 + $0x28c] sm:%s512]
          %840 = vst [vmem:[%s520 + $0x27c] sm:%s512] %v839
          %v841 = vld [vmem:[%s519 + $0x274] sm:%s512]
          %842 = vst [vmem:[%s520 + $0x280] sm:%s512] %v841
          %v843 = vld [vmem:[%s519 + $0x290] sm:%s512]
          %844 = vst [vmem:[%s520 + $0x284] sm:%s512] %v843
          %v845 = vld [vmem:[%s519 + $0x278] sm:%s512]
          %846 = vst [vmem:[%s520 + $0x288] sm:%s512] %v845
          %v847 = vld [vmem:[%s519 + $0x294] sm:%s512]
          %848 = vst [vmem:[%s520 + $0x28c] sm:%s512] %v847
          %v849 = vld [vmem:[%s519 + $0x27c] sm:%s512]
          %850 = vst [vmem:[%s520 + $0x290] sm:%s512] %v849
          %v851 = vld [vmem:[%s519 + $0x298] sm:%s512]
          %852 = vst [vmem:[%s520 + $0x294] sm:%s512] %v851
          %v853 = vld [vmem:[%s519 + $0x280] sm:%s512]
          %854 = vst [vmem:[%s520 + $0x298] sm:%s512] %v853
          %v855 = vld [vmem:[%s519 + $0x29c] sm:%s512]
          %856 = vst [vmem:[%s520 + $0x29c] sm:%s512] %v855
          %v857 = vld [vmem:[%s519 + $0x2a0] sm:%s512]
          %858 = vst [vmem:[%s520 + $0x2a0] sm:%s512] %v857
          %v859 = vld [vmem:[%s519 + $0x2bc] sm:%s512]
          %860 = vst [vmem:[%s520 + $0x2a4] sm:%s512] %v859
          %v861 = vld [vmem:[%s519 + $0x2a4] sm:%s512]
          %862 = vst [vmem:[%s520 + $0x2a8] sm:%s512] %v861
          %v863 = vld [vmem:[%s519 + $0x2c0] sm:%s512]
          %864 = vst [vmem:[%s520 + $0x2ac] sm:%s512] %v863
          %v865 = vld [vmem:[%s519 + $0x2a8] sm:%s512]
          %866 = vst [vmem:[%s520 + $0x2b0] sm:%s512] %v865
          %v867 = vld [vmem:[%s519 + $0x2c4] sm:%s512]
          %868 = vst [vmem:[%s520 + $0x2b4] sm:%s512] %v867
          %v869 = vld [vmem:[%s519 + $0x2ac] sm:%s512]
          %870 = vst [vmem:[%s520 + $0x2b8] sm:%s512] %v869
          %v871 = vld [vmem:[%s519 + $0x2c8] sm:%s512]
          %872 = vst [vmem:[%s520 + $0x2bc] sm:%s512] %v871
          %v873 = vld [vmem:[%s519 + $0x2b0] sm:%s512]
          %874 = vst [vmem:[%s520 + $0x2c0] sm:%s512] %v873
          %v875 = vld [vmem:[%s519 + $0x2cc] sm:%s512]
          %876 = vst [vmem:[%s520 + $0x2c4] sm:%s512] %v875
          %v877 = vld [vmem:[%s519 + $0x2b4] sm:%s512]
          %878 = vst [vmem:[%s520 + $0x2c8] sm:%s512] %v877
          %v879 = vld [vmem:[%s519 + $0x2d0] sm:%s512]
          %880 = vst [vmem:[%s520 + $0x2cc] sm:%s512] %v879
          %v881 = vld [vmem:[%s519 + $0x2b8] sm:%s512]
          %882 = vst [vmem:[%s520 + $0x2d0] sm:%s512] %v881
          %v883 = vld [vmem:[%s519 + $0x2d4] sm:%s512]
          %884 = vst [vmem:[%s520 + $0x2d4] sm:%s512] %v883
          %v885 = vld [vmem:[%s519 + $0x2d8] sm:%s512]
          %886 = vst [vmem:[%s520 + $0x2d8] sm:%s512] %v885
          %v887 = vld [vmem:[%s519 + $0x2f4] sm:%s512]
          %888 = vst [vmem:[%s520 + $0x2dc] sm:%s512] %v887
          %v889 = vld [vmem:[%s519 + $0x2dc] sm:%s512]
          %890 = vst [vmem:[%s520 + $0x2e0] sm:%s512] %v889
          %v891 = vld [vmem:[%s519 + $0x2f8] sm:%s512]
          %892 = vst [vmem:[%s520 + $0x2e4] sm:%s512] %v891
          %v893 = vld [vmem:[%s519 + $0x2e0] sm:%s512]
          %894 = vst [vmem:[%s520 + $0x2e8] sm:%s512] %v893
          %v895 = vld [vmem:[%s519 + $0x2fc] sm:%s512]
          %896 = vst [vmem:[%s520 + $0x2ec] sm:%s512] %v895
          %v897 = vld [vmem:[%s519 + $0x2e4] sm:%s512]
          %898 = vst [vmem:[%s520 + $0x2f0] sm:%s512] %v897
          %v899 = vld [vmem:[%s519 + $0x300] sm:%s512]
          %900 = vst [vmem:[%s520 + $0x2f4] sm:%s512] %v899
          %v901 = vld [vmem:[%s519 + $0x2e8] sm:%s512]
          %902 = vst [vmem:[%s520 + $0x2f8] sm:%s512] %v901
          %v903 = vld [vmem:[%s519 + $0x304] sm:%s512]
          %904 = vst [vmem:[%s520 + $0x2fc] sm:%s512] %v903
          %v905 = vld [vmem:[%s519 + $0x2ec] sm:%s512]
          %906 = vst [vmem:[%s520 + $0x300] sm:%s512] %v905
          %v907 = vld [vmem:[%s519 + $0x308] sm:%s512]
          %908 = vst [vmem:[%s520 + $0x304] sm:%s512] %v907
          %v909 = vld [vmem:[%s519 + $0x2f0] sm:%s512]
          %910 = vst [vmem:[%s520 + $0x308] sm:%s512] %v909
          %v911 = vld [vmem:[%s519 + $0x30c] sm:%s512]
          %912 = vst [vmem:[%s520 + $0x30c] sm:%s512] %v911
          %v913 = vld [vmem:[%s519 + $0x310] sm:%s512]
          %914 = vst [vmem:[%s520 + $0x310] sm:%s512] %v913
          %v915 = vld [vmem:[%s519 + $0x32c] sm:%s512]
          %916 = vst [vmem:[%s520 + $0x314] sm:%s512] %v915
          %v917 = vld [vmem:[%s519 + $0x314] sm:%s512]
          %918 = vst [vmem:[%s520 + $0x318] sm:%s512] %v917
          %v919 = vld [vmem:[%s519 + $0x330] sm:%s512]
          %920 = vst [vmem:[%s520 + $0x31c] sm:%s512] %v919
          %v921 = vld [vmem:[%s519 + $0x318] sm:%s512]
          %922 = vst [vmem:[%s520 + $0x320] sm:%s512] %v921
          %v923 = vld [vmem:[%s519 + $0x334] sm:%s512]
          %924 = vst [vmem:[%s520 + $0x324] sm:%s512] %v923
          %v925 = vld [vmem:[%s519 + $0x31c] sm:%s512]
          %926 = vst [vmem:[%s520 + $0x328] sm:%s512] %v925
          %v927 = vld [vmem:[%s519 + $0x338] sm:%s512]
          %928 = vst [vmem:[%s520 + $0x32c] sm:%s512] %v927
          %v929 = vld [vmem:[%s519 + $0x320] sm:%s512]
          %930 = vst [vmem:[%s520 + $0x330] sm:%s512] %v929
          %v931 = vld [vmem:[%s519 + $0x33c] sm:%s512]
          %932 = vst [vmem:[%s520 + $0x334] sm:%s512] %v931
          %v933 = vld [vmem:[%s519 + $0x324] sm:%s512]
          %934 = vst [vmem:[%s520 + $0x338] sm:%s512] %v933
          %v935 = vld [vmem:[%s519 + $0x340] sm:%s512]
          %936 = vst [vmem:[%s520 + $0x33c] sm:%s512] %v935
          %v937 = vld [vmem:[%s519 + $0x328] sm:%s512]
          %938 = vst [vmem:[%s520 + $0x340] sm:%s512] %v937
          %v939 = vld [vmem:[%s519 + $0x344] sm:%s512]
          %940 = vst [vmem:[%s520 + $0x344] sm:%s512] %v939
          %v941 = vld [vmem:[%s519 + $0x348] sm:%s512]
          %942 = vst [vmem:[%s520 + $0x348] sm:%s512] %v941
          %v943 = vld [vmem:[%s519 + $0x364] sm:%s512]
          %944 = vst [vmem:[%s520 + $0x34c] sm:%s512] %v943
          %v945 = vld [vmem:[%s519 + $0x34c] sm:%s512]
          %946 = vst [vmem:[%s520 + $0x350] sm:%s512] %v945
          %v947 = vld [vmem:[%s519 + $0x368] sm:%s512]
          %948 = vst [vmem:[%s520 + $0x354] sm:%s512] %v947
          %v949 = vld [vmem:[%s519 + $0x350] sm:%s512]
          %950 = vst [vmem:[%s520 + $0x358] sm:%s512] %v949
          %v951 = vld [vmem:[%s519 + $0x36c] sm:%s512]
          %952 = vst [vmem:[%s520 + $0x35c] sm:%s512] %v951
          %v953 = vld [vmem:[%s519 + $0x354] sm:%s512]
          %954 = vst [vmem:[%s520 + $0x360] sm:%s512] %v953
          %v955 = vld [vmem:[%s519 + $0x370] sm:%s512]
          %956 = vst [vmem:[%s520 + $0x364] sm:%s512] %v955
          %v957 = vld [vmem:[%s519 + $0x358] sm:%s512]
          %958 = vst [vmem:[%s520 + $0x368] sm:%s512] %v957
          %v959 = vld [vmem:[%s519 + $0x374] sm:%s512]
          %960 = vst [vmem:[%s520 + $0x36c] sm:%s512] %v959
          %v961 = vld [vmem:[%s519 + $0x35c] sm:%s512]
          %962 = vst [vmem:[%s520 + $0x370] sm:%s512] %v961
          %v963 = vld [vmem:[%s519 + $0x378] sm:%s512]
          %964 = vst [vmem:[%s520 + $0x374] sm:%s512] %v963
          %v965 = vld [vmem:[%s519 + $0x360] sm:%s512]
          %966 = vst [vmem:[%s520 + $0x378] sm:%s512] %v965
          %v967 = vld [vmem:[%s519 + $0x37c] sm:%s512]
          %968 = vst [vmem:[%s520 + $0x37c] sm:%s512] %v967
        $region60: #{tpu_custom_call.1} parent=47 // loop_footer
          %s518 = sadd.s32 1, %s514
        $region61: #{tpu_custom_call.1} parent=47 // loop_footer_branch
          %513 = sbr.rel target = $region57
        $region62: #{tpu_custom_call.1} parent=47 // loop_exit
          _
      $region48: #{tpu_custom_call.1} parent=32 // pred_fallthru
        _
    $region33: #{tpu_custom_call.1} parent=1 // pred_fallthru
      _
    // Predicated region
    $region34: #{tpu_custom_call.1} parent=1 // pred_check
      %p34 = pneg %p30
    $region35: #{tpu_custom_call.1} parent=1 // pred_check_branch
      %36 = sbr.rel (%p34) target = $region37
    $region36: #{tpu_custom_call.1} parent=1 // pred_region
      %s37 = sshllo.u32 0, 4
      loop: start=0, step=1, limit=1
      $region38: #{tpu_custom_call.1} parent=36 // loop_pre_header
        _
      $region39: #{tpu_custom_call.1} parent=36 // loop_header
        %s39 = sphi 0, %s43
        %p40 = scmp.ge.s32.totalorder %s39, 1
        %s44 = sphi %s7, %s7
        %s45 = sphi [#allocation2], [#allocation2]
      $region40: #{tpu_custom_call.1} parent=36 // loop_header_branch
        %42 = sbr.rel (%p40) target = $region44
      $region41: #{tpu_custom_call.1} parent=36 // loop_body
        %v46 = vld [vmem:[%s44] sm:%s37]
        %47 = vst [vmem:[%s45] sm:%s37] %v46
        %v48 = vld [vmem:[%s44 + $0x1c] sm:%s37]
        %49 = vst [vmem:[%s45 + $0x4] sm:%s37] %v48
        %v50 = vld [vmem:[%s44 + $0x4] sm:%s37]
        %51 = vst [vmem:[%s45 + $0x8] sm:%s37] %v50
        %v52 = vld [vmem:[%s44 + $0x20] sm:%s37]
        %53 = vst [vmem:[%s45 + $0xc] sm:%s37] %v52
        %v54 = vld [vmem:[%s44 + $0x8] sm:%s37]
        %55 = vst [vmem:[%s45 + $0x10] sm:%s37] %v54
        %v56 = vld [vmem:[%s44 + $0x24] sm:%s37]
        %57 = vst [vmem:[%s45 + $0x14] sm:%s37] %v56
        %v58 = vld [vmem:[%s44 + $0xc] sm:%s37]
        %59 = vst [vmem:[%s45 + $0x18] sm:%s37] %v58
        %v60 = vld [vmem:[%s44 + $0x28] sm:%s37]
        %61 = vst [vmem:[%s45 + $0x1c] sm:%s37] %v60
        %v62 = vld [vmem:[%s44 + $0x10] sm:%s37]
        %63 = vst [vmem:[%s45 + $0x20] sm:%s37] %v62
        %v64 = vld [vmem:[%s44 + $0x2c] sm:%s37]
        %65 = vst [vmem:[%s45 + $0x24] sm:%s37] %v64
        %v66 = vld [vmem:[%s44 + $0x14] sm:%s37]
        %67 = vst [vmem:[%s45 + $0x28] sm:%s37] %v66
        %v68 = vld [vmem:[%s44 + $0x30] sm:%s37]
        %69 = vst [vmem:[%s45 + $0x2c] sm:%s37] %v68
        %v70 = vld [vmem:[%s44 + $0x18] sm:%s37]
        %71 = vst [vmem:[%s45 + $0x30] sm:%s37] %v70
        %v72 = vld [vmem:[%s44 + $0x34] sm:%s37]
        %73 = vst [vmem:[%s45 + $0x34] sm:%s37] %v72
        %v74 = vld [vmem:[%s44 + $0x38] sm:%s37]
        %75 = vst [vmem:[%s45 + $0x38] sm:%s37] %v74
        %v76 = vld [vmem:[%s44 + $0x54] sm:%s37]
        %77 = vst [vmem:[%s45 + $0x3c] sm:%s37] %v76
        %v78 = vld [vmem:[%s44 + $0x3c] sm:%s37]
        %79 = vst [vmem:[%s45 + $0x40] sm:%s37] %v78
        %v80 = vld [vmem:[%s44 + $0x58] sm:%s37]
        %81 = vst [vmem:[%s45 + $0x44] sm:%s37] %v80
        %v82 = vld [vmem:[%s44 + $0x40] sm:%s37]
        %83 = vst [vmem:[%s45 + $0x48] sm:%s37] %v82
        %v84 = vld [vmem:[%s44 + $0x5c] sm:%s37]
        %85 = vst [vmem:[%s45 + $0x4c] sm:%s37] %v84
        %v86 = vld [vmem:[%s44 + $0x44] sm:%s37]
        %87 = vst [vmem:[%s45 + $0x50] sm:%s37] %v86
        %v88 = vld [vmem:[%s44 + $0x60] sm:%s37]
        %89 = vst [vmem:[%s45 + $0x54] sm:%s37] %v88
        %v90 = vld [vmem:[%s44 + $0x48] sm:%s37]
        %91 = vst [vmem:[%s45 + $0x58] sm:%s37] %v90
        %v92 = vld [vmem:[%s44 + $0x64] sm:%s37]
        %93 = vst [vmem:[%s45 + $0x5c] sm:%s37] %v92
        %v94 = vld [vmem:[%s44 + $0x4c] sm:%s37]
        %95 = vst [vmem:[%s45 + $0x60] sm:%s37] %v94
        %v96 = vld [vmem:[%s44 + $0x68] sm:%s37]
        %97 = vst [vmem:[%s45 + $0x64] sm:%s37] %v96
        %v98 = vld [vmem:[%s44 + $0x50] sm:%s37]
        %99 = vst [vmem:[%s45 + $0x68] sm:%s37] %v98
        %v100 = vld [vmem:[%s44 + $0x6c] sm:%s37]
        %101 = vst [vmem:[%s45 + $0x6c] sm:%s37] %v100
        %v102 = vld [vmem:[%s44 + $0x70] sm:%s37]
        %103 = vst [vmem:[%s45 + $0x70] sm:%s37] %v102
        %v104 = vld [vmem:[%s44 + $0x8c] sm:%s37]
        %105 = vst [vmem:[%s45 + $0x74] sm:%s37] %v104
        %v106 = vld [vmem:[%s44 + $0x74] sm:%s37]
        %107 = vst [vmem:[%s45 + $0x78] sm:%s37] %v106
        %v108 = vld [vmem:[%s44 + $0x90] sm:%s37]
        %109 = vst [vmem:[%s45 + $0x7c] sm:%s37] %v108
        %v110 = vld [vmem:[%s44 + $0x78] sm:%s37]
        %111 = vst [vmem:[%s45 + $0x80] sm:%s37] %v110
        %v112 = vld [vmem:[%s44 + $0x94] sm:%s37]
        %113 = vst [vmem:[%s45 + $0x84] sm:%s37] %v112
        %v114 = vld [vmem:[%s44 + $0x7c] sm:%s37]
        %115 = vst [vmem:[%s45 + $0x88] sm:%s37] %v114
        %v116 = vld [vmem:[%s44 + $0x98] sm:%s37]
        %117 = vst [vmem:[%s45 + $0x8c] sm:%s37] %v116
        %v118 = vld [vmem:[%s44 + $0x80] sm:%s37]
        %119 = vst [vmem:[%s45 + $0x90] sm:%s37] %v118
        %v120 = vld [vmem:[%s44 + $0x9c] sm:%s37]
        %121 = vst [vmem:[%s45 + $0x94] sm:%s37] %v120
        %v122 = vld [vmem:[%s44 + $0x84] sm:%s37]
        %123 = vst [vmem:[%s45 + $0x98] sm:%s37] %v122
        %v124 = vld [vmem:[%s44 + $0xa0] sm:%s37]
        %125 = vst [vmem:[%s45 + $0x9c] sm:%s37] %v124
        %v126 = vld [vmem:[%s44 + $0x88] sm:%s37]
        %127 = vst [vmem:[%s45 + $0xa0] sm:%s37] %v126
        %v128 = vld [vmem:[%s44 + $0xa4] sm:%s37]
        %129 = vst [vmem:[%s45 + $0xa4] sm:%s37] %v128
        %v130 = vld [vmem:[%s44 + $0xa8] sm:%s37]
        %131 = vst [vmem:[%s45 + $0xa8] sm:%s37] %v130
        %v132 = vld [vmem:[%s44 + $0xc4] sm:%s37]
        %133 = vst [vmem:[%s45 + $0xac] sm:%s37] %v132
        %v134 = vld [vmem:[%s44 + $0xac] sm:%s37]
        %135 = vst [vmem:[%s45 + $0xb0] sm:%s37] %v134
        %v136 = vld [vmem:[%s44 + $0xc8] sm:%s37]
        %137 = vst [vmem:[%s45 + $0xb4] sm:%s37] %v136
        %v138 = vld [vmem:[%s44 + $0xb0] sm:%s37]
        %139 = vst [vmem:[%s45 + $0xb8] sm:%s37] %v138
        %v140 = vld [vmem:[%s44 + $0xcc] sm:%s37]
        %141 = vst [vmem:[%s45 + $0xbc] sm:%s37] %v140
        %v142 = vld [vmem:[%s44 + $0xb4] sm:%s37]
        %143 = vst [vmem:[%s45 + $0xc0] sm:%s37] %v142
        %v144 = vld [vmem:[%s44 + $0xd0] sm:%s37]
        %145 = vst [vmem:[%s45 + $0xc4] sm:%s37] %v144
        %v146 = vld [vmem:[%s44 + $0xb8] sm:%s37]
        %147 = vst [vmem:[%s45 + $0xc8] sm:%s37] %v146
        %v148 = vld [vmem:[%s44 + $0xd4] sm:%s37]
        %149 = vst [vmem:[%s45 + $0xcc] sm:%s37] %v148
        %v150 = vld [vmem:[%s44 + $0xbc] sm:%s37]
        %151 = vst [vmem:[%s45 + $0xd0] sm:%s37] %v150
        %v152 = vld [vmem:[%s44 + $0xd8] sm:%s37]
        %153 = vst [vmem:[%s45 + $0xd4] sm:%s37] %v152
        %v154 = vld [vmem:[%s44 + $0xc0] sm:%s37]
        %155 = vst [vmem:[%s45 + $0xd8] sm:%s37] %v154
        %v156 = vld [vmem:[%s44 + $0xdc] sm:%s37]
        %157 = vst [vmem:[%s45 + $0xdc] sm:%s37] %v156
        %v158 = vld [vmem:[%s44 + $0xe0] sm:%s37]
        %159 = vst [vmem:[%s45 + $0xe0] sm:%s37] %v158
        %v160 = vld [vmem:[%s44 + $0xfc] sm:%s37]
        %161 = vst [vmem:[%s45 + $0xe4] sm:%s37] %v160
        %v162 = vld [vmem:[%s44 + $0xe4] sm:%s37]
        %163 = vst [vmem:[%s45 + $0xe8] sm:%s37] %v162
        %v164 = vld [vmem:[%s44 + $0x100] sm:%s37]
        %165 = vst [vmem:[%s45 + $0xec] sm:%s37] %v164
        %v166 = vld [vmem:[%s44 + $0xe8] sm:%s37]
        %167 = vst [vmem:[%s45 + $0xf0] sm:%s37] %v166
        %v168 = vld [vmem:[%s44 + $0x104] sm:%s37]
        %169 = vst [vmem:[%s45 + $0xf4] sm:%s37] %v168
        %v170 = vld [vmem:[%s44 + $0xec] sm:%s37]
        %171 = vst [vmem:[%s45 + $0xf8] sm:%s37] %v170
        %v172 = vld [vmem:[%s44 + $0x108] sm:%s37]
        %173 = vst [vmem:[%s45 + $0xfc] sm:%s37] %v172
        %v174 = vld [vmem:[%s44 + $0xf0] sm:%s37]
        %175 = vst [vmem:[%s45 + $0x100] sm:%s37] %v174
        %v176 = vld [vmem:[%s44 + $0x10c] sm:%s37]
        %177 = vst [vmem:[%s45 + $0x104] sm:%s37] %v176
        %v178 = vld [vmem:[%s44 + $0xf4] sm:%s37]
        %179 = vst [vmem:[%s45 + $0x108] sm:%s37] %v178
        %v180 = vld [vmem:[%s44 + $0x110] sm:%s37]
        %181 = vst [vmem:[%s45 + $0x10c] sm:%s37] %v180
        %v182 = vld [vmem:[%s44 + $0xf8] sm:%s37]
        %183 = vst [vmem:[%s45 + $0x110] sm:%s37] %v182
        %v184 = vld [vmem:[%s44 + $0x114] sm:%s37]
        %185 = vst [vmem:[%s45 + $0x114] sm:%s37] %v184
        %v186 = vld [vmem:[%s44 + $0x118] sm:%s37]
        %187 = vst [vmem:[%s45 + $0x118] sm:%s37] %v186
        %v188 = vld [vmem:[%s44 + $0x134] sm:%s37]
        %189 = vst [vmem:[%s45 + $0x11c] sm:%s37] %v188
        %v190 = vld [vmem:[%s44 + $0x11c] sm:%s37]
        %191 = vst [vmem:[%s45 + $0x120] sm:%s37] %v190
        %v192 = vld [vmem:[%s44 + $0x138] sm:%s37]
        %193 = vst [vmem:[%s45 + $0x124] sm:%s37] %v192
        %v194 = vld [vmem:[%s44 + $0x120] sm:%s37]
        %195 = vst [vmem:[%s45 + $0x128] sm:%s37] %v194
        %v196 = vld [vmem:[%s44 + $0x13c] sm:%s37]
        %197 = vst [vmem:[%s45 + $0x12c] sm:%s37] %v196
        %v198 = vld [vmem:[%s44 + $0x124] sm:%s37]
        %199 = vst [vmem:[%s45 + $0x130] sm:%s37] %v198
        %v200 = vld [vmem:[%s44 + $0x140] sm:%s37]
        %201 = vst [vmem:[%s45 + $0x134] sm:%s37] %v200
        %v202 = vld [vmem:[%s44 + $0x128] sm:%s37]
        %203 = vst [vmem:[%s45 + $0x138] sm:%s37] %v202
        %v204 = vld [vmem:[%s44 + $0x144] sm:%s37]
        %205 = vst [vmem:[%s45 + $0x13c] sm:%s37] %v204
        %v206 = vld [vmem:[%s44 + $0x12c] sm:%s37]
        %207 = vst [vmem:[%s45 + $0x140] sm:%s37] %v206
        %v208 = vld [vmem:[%s44 + $0x148] sm:%s37]
        %209 = vst [vmem:[%s45 + $0x144] sm:%s37] %v208
        %v210 = vld [vmem:[%s44 + $0x130] sm:%s37]
        %211 = vst [vmem:[%s45 + $0x148] sm:%s37] %v210
        %v212 = vld [vmem:[%s44 + $0x14c] sm:%s37]
        %213 = vst [vmem:[%s45 + $0x14c] sm:%s37] %v212
        %v214 = vld [vmem:[%s44 + $0x150] sm:%s37]
        %215 = vst [vmem:[%s45 + $0x150] sm:%s37] %v214
        %v216 = vld [vmem:[%s44 + $0x16c] sm:%s37]
        %217 = vst [vmem:[%s45 + $0x154] sm:%s37] %v216
        %v218 = vld [vmem:[%s44 + $0x154] sm:%s37]
        %219 = vst [vmem:[%s45 + $0x158] sm:%s37] %v218
        %v220 = vld [vmem:[%s44 + $0x170] sm:%s37]
        %221 = vst [vmem:[%s45 + $0x15c] sm:%s37] %v220
        %v222 = vld [vmem:[%s44 + $0x158] sm:%s37]
        %223 = vst [vmem:[%s45 + $0x160] sm:%s37] %v222
        %v224 = vld [vmem:[%s44 + $0x174] sm:%s37]
        %225 = vst [vmem:[%s45 + $0x164] sm:%s37] %v224
        %v226 = vld [vmem:[%s44 + $0x15c] sm:%s37]
        %227 = vst [vmem:[%s45 + $0x168] sm:%s37] %v226
        %v228 = vld [vmem:[%s44 + $0x178] sm:%s37]
        %229 = vst [vmem:[%s45 + $0x16c] sm:%s37] %v228
        %v230 = vld [vmem:[%s44 + $0x160] sm:%s37]
        %231 = vst [vmem:[%s45 + $0x170] sm:%s37] %v230
        %v232 = vld [vmem:[%s44 + $0x17c] sm:%s37]
        %233 = vst [vmem:[%s45 + $0x174] sm:%s37] %v232
        %v234 = vld [vmem:[%s44 + $0x164] sm:%s37]
        %235 = vst [vmem:[%s45 + $0x178] sm:%s37] %v234
        %v236 = vld [vmem:[%s44 + $0x180] sm:%s37]
        %237 = vst [vmem:[%s45 + $0x17c] sm:%s37] %v236
        %v238 = vld [vmem:[%s44 + $0x168] sm:%s37]
        %239 = vst [vmem:[%s45 + $0x180] sm:%s37] %v238
        %v240 = vld [vmem:[%s44 + $0x184] sm:%s37]
        %241 = vst [vmem:[%s45 + $0x184] sm:%s37] %v240
        %v242 = vld [vmem:[%s44 + $0x188] sm:%s37]
        %243 = vst [vmem:[%s45 + $0x188] sm:%s37] %v242
        %v244 = vld [vmem:[%s44 + $0x1a4] sm:%s37]
        %245 = vst [vmem:[%s45 + $0x18c] sm:%s37] %v244
        %v246 = vld [vmem:[%s44 + $0x18c] sm:%s37]
        %247 = vst [vmem:[%s45 + $0x190] sm:%s37] %v246
        %v248 = vld [vmem:[%s44 + $0x1a8] sm:%s37]
        %249 = vst [vmem:[%s45 + $0x194] sm:%s37] %v248
        %v250 = vld [vmem:[%s44 + $0x190] sm:%s37]
        %251 = vst [vmem:[%s45 + $0x198] sm:%s37] %v250
        %v252 = vld [vmem:[%s44 + $0x1ac] sm:%s37]
        %253 = vst [vmem:[%s45 + $0x19c] sm:%s37] %v252
        %v254 = vld [vmem:[%s44 + $0x194] sm:%s37]
        %255 = vst [vmem:[%s45 + $0x1a0] sm:%s37] %v254
        %v256 = vld [vmem:[%s44 + $0x1b0] sm:%s37]
        %257 = vst [vmem:[%s45 + $0x1a4] sm:%s37] %v256
        %v258 = vld [vmem:[%s44 + $0x198] sm:%s37]
        %259 = vst [vmem:[%s45 + $0x1a8] sm:%s37] %v258
        %v260 = vld [vmem:[%s44 + $0x1b4] sm:%s37]
        %261 = vst [vmem:[%s45 + $0x1ac] sm:%s37] %v260
        %v262 = vld [vmem:[%s44 + $0x19c] sm:%s37]
        %263 = vst [vmem:[%s45 + $0x1b0] sm:%s37] %v262
        %v264 = vld [vmem:[%s44 + $0x1b8] sm:%s37]
        %265 = vst [vmem:[%s45 + $0x1b4] sm:%s37] %v264
        %v266 = vld [vmem:[%s44 + $0x1a0] sm:%s37]
        %267 = vst [vmem:[%s45 + $0x1b8] sm:%s37] %v266
        %v268 = vld [vmem:[%s44 + $0x1bc] sm:%s37]
        %269 = vst [vmem:[%s45 + $0x1bc] sm:%s37] %v268
        %v270 = vld [vmem:[%s44 + $0x1c0] sm:%s37]
        %271 = vst [vmem:[%s45 + $0x1c0] sm:%s37] %v270
        %v272 = vld [vmem:[%s44 + $0x1dc] sm:%s37]
        %273 = vst [vmem:[%s45 + $0x1c4] sm:%s37] %v272
        %v274 = vld [vmem:[%s44 + $0x1c4] sm:%s37]
        %275 = vst [vmem:[%s45 + $0x1c8] sm:%s37] %v274
        %v276 = vld [vmem:[%s44 + $0x1e0] sm:%s37]
        %277 = vst [vmem:[%s45 + $0x1cc] sm:%s37] %v276
        %v278 = vld [vmem:[%s44 + $0x1c8] sm:%s37]
        %279 = vst [vmem:[%s45 + $0x1d0] sm:%s37] %v278
        %v280 = vld [vmem:[%s44 + $0x1e4] sm:%s37]
        %281 = vst [vmem:[%s45 + $0x1d4] sm:%s37] %v280
        %v282 = vld [vmem:[%s44 + $0x1cc] sm:%s37]
        %283 = vst [vmem:[%s45 + $0x1d8] sm:%s37] %v282
        %v284 = vld [vmem:[%s44 + $0x1e8] sm:%s37]
        %285 = vst [vmem:[%s45 + $0x1dc] sm:%s37] %v284
        %v286 = vld [vmem:[%s44 + $0x1d0] sm:%s37]
        %287 = vst [vmem:[%s45 + $0x1e0] sm:%s37] %v286
        %v288 = vld [vmem:[%s44 + $0x1ec] sm:%s37]
        %289 = vst [vmem:[%s45 + $0x1e4] sm:%s37] %v288
        %v290 = vld [vmem:[%s44 + $0x1d4] sm:%s37]
        %291 = vst [vmem:[%s45 + $0x1e8] sm:%s37] %v290
        %v292 = vld [vmem:[%s44 + $0x1f0] sm:%s37]
        %293 = vst [vmem:[%s45 + $0x1ec] sm:%s37] %v292
        %v294 = vld [vmem:[%s44 + $0x1d8] sm:%s37]
        %295 = vst [vmem:[%s45 + $0x1f0] sm:%s37] %v294
        %v296 = vld [vmem:[%s44 + $0x1f4] sm:%s37]
        %297 = vst [vmem:[%s45 + $0x1f4] sm:%s37] %v296
        %v298 = vld [vmem:[%s44 + $0x1f8] sm:%s37]
        %299 = vst [vmem:[%s45 + $0x1f8] sm:%s37] %v298
        %v300 = vld [vmem:[%s44 + $0x214] sm:%s37]
        %301 = vst [vmem:[%s45 + $0x1fc] sm:%s37] %v300
        %v302 = vld [vmem:[%s44 + $0x1fc] sm:%s37]
        %303 = vst [vmem:[%s45 + $0x200] sm:%s37] %v302
        %v304 = vld [vmem:[%s44 + $0x218] sm:%s37]
        %305 = vst [vmem:[%s45 + $0x204] sm:%s37] %v304
        %v306 = vld [vmem:[%s44 + $0x200] sm:%s37]
        %307 = vst [vmem:[%s45 + $0x208] sm:%s37] %v306
        %v308 = vld [vmem:[%s44 + $0x21c] sm:%s37]
        %309 = vst [vmem:[%s45 + $0x20c] sm:%s37] %v308
        %v310 = vld [vmem:[%s44 + $0x204] sm:%s37]
        %311 = vst [vmem:[%s45 + $0x210] sm:%s37] %v310
        %v312 = vld [vmem:[%s44 + $0x220] sm:%s37]
        %313 = vst [vmem:[%s45 + $0x214] sm:%s37] %v312
        %v314 = vld [vmem:[%s44 + $0x208] sm:%s37]
        %315 = vst [vmem:[%s45 + $0x218] sm:%s37] %v314
        %v316 = vld [vmem:[%s44 + $0x224] sm:%s37]
        %317 = vst [vmem:[%s45 + $0x21c] sm:%s37] %v316
        %v318 = vld [vmem:[%s44 + $0x20c] sm:%s37]
        %319 = vst [vmem:[%s45 + $0x220] sm:%s37] %v318
        %v320 = vld [vmem:[%s44 + $0x228] sm:%s37]
        %321 = vst [vmem:[%s45 + $0x224] sm:%s37] %v320
        %v322 = vld [vmem:[%s44 + $0x210] sm:%s37]
        %323 = vst [vmem:[%s45 + $0x228] sm:%s37] %v322
        %v324 = vld [vmem:[%s44 + $0x22c] sm:%s37]
        %325 = vst [vmem:[%s45 + $0x22c] sm:%s37] %v324
        %v326 = vld [vmem:[%s44 + $0x230] sm:%s37]
        %327 = vst [vmem:[%s45 + $0x230] sm:%s37] %v326
        %v328 = vld [vmem:[%s44 + $0x24c] sm:%s37]
        %329 = vst [vmem:[%s45 + $0x234] sm:%s37] %v328
        %v330 = vld [vmem:[%s44 + $0x234] sm:%s37]
        %331 = vst [vmem:[%s45 + $0x238] sm:%s37] %v330
        %v332 = vld [vmem:[%s44 + $0x250] sm:%s37]
        %333 = vst [vmem:[%s45 + $0x23c] sm:%s37] %v332
        %v334 = vld [vmem:[%s44 + $0x238] sm:%s37]
        %335 = vst [vmem:[%s45 + $0x240] sm:%s37] %v334
        %v336 = vld [vmem:[%s44 + $0x254] sm:%s37]
        %337 = vst [vmem:[%s45 + $0x244] sm:%s37] %v336
        %v338 = vld [vmem:[%s44 + $0x23c] sm:%s37]
        %339 = vst [vmem:[%s45 + $0x248] sm:%s37] %v338
        %v340 = vld [vmem:[%s44 + $0x258] sm:%s37]
        %341 = vst [vmem:[%s45 + $0x24c] sm:%s37] %v340
        %v342 = vld [vmem:[%s44 + $0x240] sm:%s37]
        %343 = vst [vmem:[%s45 + $0x250] sm:%s37] %v342
        %v344 = vld [vmem:[%s44 + $0x25c] sm:%s37]
        %345 = vst [vmem:[%s45 + $0x254] sm:%s37] %v344
        %v346 = vld [vmem:[%s44 + $0x244] sm:%s37]
        %347 = vst [vmem:[%s45 + $0x258] sm:%s37] %v346
        %v348 = vld [vmem:[%s44 + $0x260] sm:%s37]
        %349 = vst [vmem:[%s45 + $0x25c] sm:%s37] %v348
        %v350 = vld [vmem:[%s44 + $0x248] sm:%s37]
        %351 = vst [vmem:[%s45 + $0x260] sm:%s37] %v350
        %v352 = vld [vmem:[%s44 + $0x264] sm:%s37]
        %353 = vst [vmem:[%s45 + $0x264] sm:%s37] %v352
        %v354 = vld [vmem:[%s44 + $0x268] sm:%s37]
        %355 = vst [vmem:[%s45 + $0x268] sm:%s37] %v354
        %v356 = vld [vmem:[%s44 + $0x284] sm:%s37]
        %357 = vst [vmem:[%s45 + $0x26c] sm:%s37] %v356
        %v358 = vld [vmem:[%s44 + $0x26c] sm:%s37]
        %359 = vst [vmem:[%s45 + $0x270] sm:%s37] %v358
        %v360 = vld [vmem:[%s44 + $0x288] sm:%s37]
        %361 = vst [vmem:[%s45 + $0x274] sm:%s37] %v360
        %v362 = vld [vmem:[%s44 + $0x270] sm:%s37]
        %363 = vst [vmem:[%s45 + $0x278] sm:%s37] %v362
        %v364 = vld [vmem:[%s44 + $0x28c] sm:%s37]
        %365 = vst [vmem:[%s45 + $0x27c] sm:%s37] %v364
        %v366 = vld [vmem:[%s44 + $0x274] sm:%s37]
        %367 = vst [vmem:[%s45 + $0x280] sm:%s37] %v366
        %v368 = vld [vmem:[%s44 + $0x290] sm:%s37]
        %369 = vst [vmem:[%s45 + $0x284] sm:%s37] %v368
        %v370 = vld [vmem:[%s44 + $0x278] sm:%s37]
        %371 = vst [vmem:[%s45 + $0x288] sm:%s37] %v370
        %v372 = vld [vmem:[%s44 + $0x294] sm:%s37]
        %373 = vst [vmem:[%s45 + $0x28c] sm:%s37] %v372
        %v374 = vld [vmem:[%s44 + $0x27c] sm:%s37]
        %375 = vst [vmem:[%s45 + $0x290] sm:%s37] %v374
        %v376 = vld [vmem:[%s44 + $0x298] sm:%s37]
        %377 = vst [vmem:[%s45 + $0x294] sm:%s37] %v376
        %v378 = vld [vmem:[%s44 + $0x280] sm:%s37]
        %379 = vst [vmem:[%s45 + $0x298] sm:%s37] %v378
        %v380 = vld [vmem:[%s44 + $0x29c] sm:%s37]
        %381 = vst [vmem:[%s45 + $0x29c] sm:%s37] %v380
        %v382 = vld [vmem:[%s44 + $0x2a0] sm:%s37]
        %383 = vst [vmem:[%s45 + $0x2a0] sm:%s37] %v382
        %v384 = vld [vmem:[%s44 + $0x2bc] sm:%s37]
        %385 = vst [vmem:[%s45 + $0x2a4] sm:%s37] %v384
        %v386 = vld [vmem:[%s44 + $0x2a4] sm:%s37]
        %387 = vst [vmem:[%s45 + $0x2a8] sm:%s37] %v386
        %v388 = vld [vmem:[%s44 + $0x2c0] sm:%s37]
        %389 = vst [vmem:[%s45 + $0x2ac] sm:%s37] %v388
        %v390 = vld [vmem:[%s44 + $0x2a8] sm:%s37]
        %391 = vst [vmem:[%s45 + $0x2b0] sm:%s37] %v390
        %v392 = vld [vmem:[%s44 + $0x2c4] sm:%s37]
        %393 = vst [vmem:[%s45 + $0x2b4] sm:%s37] %v392
        %v394 = vld [vmem:[%s44 + $0x2ac] sm:%s37]
        %395 = vst [vmem:[%s45 + $0x2b8] sm:%s37] %v394
        %v396 = vld [vmem:[%s44 + $0x2c8] sm:%s37]
        %397 = vst [vmem:[%s45 + $0x2bc] sm:%s37] %v396
        %v398 = vld [vmem:[%s44 + $0x2b0] sm:%s37]
        %399 = vst [vmem:[%s45 + $0x2c0] sm:%s37] %v398
        %v400 = vld [vmem:[%s44 + $0x2cc] sm:%s37]
        %401 = vst [vmem:[%s45 + $0x2c4] sm:%s37] %v400
        %v402 = vld [vmem:[%s44 + $0x2b4] sm:%s37]
        %403 = vst [vmem:[%s45 + $0x2c8] sm:%s37] %v402
        %v404 = vld [vmem:[%s44 + $0x2d0] sm:%s37]
        %405 = vst [vmem:[%s45 + $0x2cc] sm:%s37] %v404
        %v406 = vld [vmem:[%s44 + $0x2b8] sm:%s37]
        %407 = vst [vmem:[%s45 + $0x2d0] sm:%s37] %v406
        %v408 = vld [vmem:[%s44 + $0x2d4] sm:%s37]
        %409 = vst [vmem:[%s45 + $0x2d4] sm:%s37] %v408
        %v410 = vld [vmem:[%s44 + $0x2d8] sm:%s37]
        %411 = vst [vmem:[%s45 + $0x2d8] sm:%s37] %v410
        %v412 = vld [vmem:[%s44 + $0x2f4] sm:%s37]
        %413 = vst [vmem:[%s45 + $0x2dc] sm:%s37] %v412
        %v414 = vld [vmem:[%s44 + $0x2dc] sm:%s37]
        %415 = vst [vmem:[%s45 + $0x2e0] sm:%s37] %v414
        %v416 = vld [vmem:[%s44 + $0x2f8] sm:%s37]
        %417 = vst [vmem:[%s45 + $0x2e4] sm:%s37] %v416
        %v418 = vld [vmem:[%s44 + $0x2e0] sm:%s37]
        %419 = vst [vmem:[%s45 + $0x2e8] sm:%s37] %v418
        %v420 = vld [vmem:[%s44 + $0x2fc] sm:%s37]
        %421 = vst [vmem:[%s45 + $0x2ec] sm:%s37] %v420
        %v422 = vld [vmem:[%s44 + $0x2e4] sm:%s37]
        %423 = vst [vmem:[%s45 + $0x2f0] sm:%s37] %v422
        %v424 = vld [vmem:[%s44 + $0x300] sm:%s37]
        %425 = vst [vmem:[%s45 + $0x2f4] sm:%s37] %v424
        %v426 = vld [vmem:[%s44 + $0x2e8] sm:%s37]
        %427 = vst [vmem:[%s45 + $0x2f8] sm:%s37] %v426
        %v428 = vld [vmem:[%s44 + $0x304] sm:%s37]
        %429 = vst [vmem:[%s45 + $0x2fc] sm:%s37] %v428
        %v430 = vld [vmem:[%s44 + $0x2ec] sm:%s37]
        %431 = vst [vmem:[%s45 + $0x300] sm:%s37] %v430
        %v432 = vld [vmem:[%s44 + $0x308] sm:%s37]
        %433 = vst [vmem:[%s45 + $0x304] sm:%s37] %v432
        %v434 = vld [vmem:[%s44 + $0x2f0] sm:%s37]
        %435 = vst [vmem:[%s45 + $0x308] sm:%s37] %v434
        %v436 = vld [vmem:[%s44 + $0x30c] sm:%s37]
        %437 = vst [vmem:[%s45 + $0x30c] sm:%s37] %v436
        %v438 = vld [vmem:[%s44 + $0x310] sm:%s37]
        %439 = vst [vmem:[%s45 + $0x310] sm:%s37] %v438
        %v440 = vld [vmem:[%s44 + $0x32c] sm:%s37]
        %441 = vst [vmem:[%s45 + $0x314] sm:%s37] %v440
        %v442 = vld [vmem:[%s44 + $0x314] sm:%s37]
        %443 = vst [vmem:[%s45 + $0x318] sm:%s37] %v442
        %v444 = vld [vmem:[%s44 + $0x330] sm:%s37]
        %445 = vst [vmem:[%s45 + $0x31c] sm:%s37] %v444
        %v446 = vld [vmem:[%s44 + $0x318] sm:%s37]
        %447 = vst [vmem:[%s45 + $0x320] sm:%s37] %v446
        %v448 = vld [vmem:[%s44 + $0x334] sm:%s37]
        %449 = vst [vmem:[%s45 + $0x324] sm:%s37] %v448
        %v450 = vld [vmem:[%s44 + $0x31c] sm:%s37]
        %451 = vst [vmem:[%s45 + $0x328] sm:%s37] %v450
        %v452 = vld [vmem:[%s44 + $0x338] sm:%s37]
        %453 = vst [vmem:[%s45 + $0x32c] sm:%s37] %v452
        %v454 = vld [vmem:[%s44 + $0x320] sm:%s37]
        %455 = vst [vmem:[%s45 + $0x330] sm:%s37] %v454
        %v456 = vld [vmem:[%s44 + $0x33c] sm:%s37]
        %457 = vst [vmem:[%s45 + $0x334] sm:%s37] %v456
        %v458 = vld [vmem:[%s44 + $0x324] sm:%s37]
        %459 = vst [vmem:[%s45 + $0x338] sm:%s37] %v458
        %v460 = vld [vmem:[%s44 + $0x340] sm:%s37]
        %461 = vst [vmem:[%s45 + $0x33c] sm:%s37] %v460
        %v462 = vld [vmem:[%s44 + $0x328] sm:%s37]
        %463 = vst [vmem:[%s45 + $0x340] sm:%s37] %v462
        %v464 = vld [vmem:[%s44 + $0x344] sm:%s37]
        %465 = vst [vmem:[%s45 + $0x344] sm:%s37] %v464
        %v466 = vld [vmem:[%s44 + $0x348] sm:%s37]
        %467 = vst [vmem:[%s45 + $0x348] sm:%s37] %v466
        %v468 = vld [vmem:[%s44 + $0x364] sm:%s37]
        %469 = vst [vmem:[%s45 + $0x34c] sm:%s37] %v468
        %v470 = vld [vmem:[%s44 + $0x34c] sm:%s37]
        %471 = vst [vmem:[%s45 + $0x350] sm:%s37] %v470
        %v472 = vld [vmem:[%s44 + $0x368] sm:%s37]
        %473 = vst [vmem:[%s45 + $0x354] sm:%s37] %v472
        %v474 = vld [vmem:[%s44 + $0x350] sm:%s37]
        %475 = vst [vmem:[%s45 + $0x358] sm:%s37] %v474
        %v476 = vld [vmem:[%s44 + $0x36c] sm:%s37]
        %477 = vst [vmem:[%s45 + $0x35c] sm:%s37] %v476
        %v478 = vld [vmem:[%s44 + $0x354] sm:%s37]
        %479 = vst [vmem:[%s45 + $0x360] sm:%s37] %v478
        %v480 = vld [vmem:[%s44 + $0x370] sm:%s37]
        %481 = vst [vmem:[%s45 + $0x364] sm:%s37] %v480
        %v482 = vld [vmem:[%s44 + $0x358] sm:%s37]
        %483 = vst [vmem:[%s45 + $0x368] sm:%s37] %v482
        %v484 = vld [vmem:[%s44 + $0x374] sm:%s37]
        %485 = vst [vmem:[%s45 + $0x36c] sm:%s37] %v484
        %v486 = vld [vmem:[%s44 + $0x35c] sm:%s37]
        %487 = vst [vmem:[%s45 + $0x370] sm:%s37] %v486
        %v488 = vld [vmem:[%s44 + $0x378] sm:%s37]
        %489 = vst [vmem:[%s45 + $0x374] sm:%s37] %v488
        %v490 = vld [vmem:[%s44 + $0x360] sm:%s37]
        %491 = vst [vmem:[%s45 + $0x378] sm:%s37] %v490
        %v492 = vld [vmem:[%s44 + $0x37c] sm:%s37]
        %493 = vst [vmem:[%s45 + $0x37c] sm:%s37] %v492
      $region42: #{tpu_custom_call.1} parent=36 // loop_footer
        %s43 = sadd.s32 1, %s39
      $region43: #{tpu_custom_call.1} parent=36 // loop_footer_branch
        %38 = sbr.rel target = $region39
      $region44: #{tpu_custom_call.1} parent=36 // loop_exit
        _
    $region37: #{tpu_custom_call.1} parent=1 // pred_fallthru
      _
    // Predicated region
    $region63: #{tpu_custom_call.1} parent=1 // pred_check
      _
    $region64: #{tpu_custom_call.1} parent=1 // pred_check_branch
      %971 = sbr.rel (0) target = $region66
    $region65: #{tpu_custom_call.1} parent=1 // pred_region
      %972 = vsyncadd [#allocation3], 14336
    $region66: #{tpu_custom_call.1} parent=1 // pred_fallthru
      _
    %v973 = vld [vmem:[%s0] sm:$0xf]
    %v974 = vld [vmem:[%s1] sm:$0xf]
    %v975 = vld [vmem:[%s1 + $0x4] sm:$0xf]
    %v976 = vld [vmem:[%s1 + $0x8] sm:$0xf]
    %v977 = vld [vmem:[%s1 + $0xc] sm:$0xf]
    %v978 = vld [vmem:[%s1 + $0x10] sm:$0xf]
    %v979 = vld [vmem:[%s1 + $0x14] sm:$0xf]
    %v980 = vld [vmem:[%s1 + $0x18] sm:$0xf]
    %v981 = vld [vmem:[%s1 + $0x1c] sm:$0xf]
    %v990 = vunpack.c.l.b16 %v974
    %v991 = vunpack.c.l.b16 %v975
    %v992 = vunpack.c.l.b16 %v976
    %v993 = vunpack.c.l.b16 %v977
    %v994 = vunpack.c.l.b16 %v978
    %v995 = vunpack.c.l.b16 %v979
    %v996 = vunpack.c.l.b16 %v980
    %v997 = vunpack.c.l.b16 %v981
    %v998 = vpack.c.b16 %v991, %v990
    %v999 = vpack.c.b16 %v993, %v992
    %v1000 = vpack.c.b16 %v995, %v994
    %v1001 = vpack.c.b16 %v997, %v996
    %vm1006 = vcmask 523264
    %v1008 = vsel %vm1006, %v973, 0
    %1010 = vmatprep.subr.bf16.mxu0 0
    %1011 = vmatpush1.bf16.msra.mxu0 %v998
    %1012 = vmatprep.subr.bf16.mxu0 0
    %1013 = vmatpush1.bf16.msra.mxu0 %v999
    %1014 = vmatprep.subr.bf16.mxu0 0
    %1015 = vmatpush1.bf16.msra.mxu0 %v1000
    %1016 = vmatprep.subr.bf16.mxu0 0
    %1017 = vmatpush1.bf16.msra.mxu0 %v1001
    %1018 = vmatprep.subr.bf16.mxu0 0
    %1019 = vmatpush1.bf16.msra.mxu0 0
    %1020 = vmatprep.subr.bf16.mxu0 0
    %1021 = vmatpush1.bf16.msra.mxu0 0
    %1022 = vmatprep.subr.bf16.mxu0 0
    %1023 = vmatpush1.bf16.msra.mxu0 0
    %1024 = vmatprep.subr.bf16.mxu0 0
    %1025 = vmatpush1.bf16.msra.mxu0 0
    %1026 = vmatprep.subr.bf16.mxu0 0
    %1027 = vmatpush1.bf16.msra.mxu0 0
    %1028 = vmatprep.subr.bf16.mxu0 0
    %1029 = vmatpush1.bf16.msra.mxu0 0
    %1030 = vmatprep.subr.bf16.mxu0 0
    %1031 = vmatpush1.bf16.msra.mxu0 0
    %1032 = vmatprep.subr.bf16.mxu0 0
    %1033 = vmatpush1.bf16.msra.mxu0 0
    %1034 = vmatprep.subr.bf16.mxu0 0
    %1035 = vmatpush1.bf16.msra.mxu0 0
    %1036 = vmatprep.subr.bf16.mxu0 0
    %1037 = vmatpush1.bf16.msra.mxu0 0
    %1038 = vmatprep.subr.bf16.mxu0 0
    %1039 = vmatpush1.bf16.msra.mxu0 0
    %1040 = vmatprep.subr.bf16.mxu0 0
    %1041 = vmatpush1.bf16.msra.mxu0 0
    %1042 = vmatprep.mubr.bf16.mxu0 0
    %1043 = vmatmul.mubr.bf16.gmra.mrb[0].mxu0 %v1008
    %v1044 = vpop.f32.mrb[0].mxu0
    %v1045 = vadd.f32 0.0, %v1044
    %v1046 = vpop.f32.mrb[0].mxu0
    %v1047 = vpop.f32.mrb[0].mxu0
    %v1048 = vpop.f32.mrb[0].mxu0
    %1049 = vdwg.mxu0
    %v1050 = vld [vmem:[%s5] ss:$0 sm:$0xff]
    %v1051 = vld [vmem:[%s5 + $0x1] ss:$0 sm:$0xff]
    %v1052 = vrot.slane %v1045, 4
    %v1053 = vadd.f32 %v1045, %v1052
    %v1054 = vrot.slane %v1053, 2
    %v1055 = vadd.f32 %v1053, %v1054
    %v1056 = vrot.slane %v1055, 1
    %v1057 = vadd.f32 %v1055, %v1056
    %v1058 = vmul.f32 %v1045, %v1045
    %v1059 = vrot.slane %v1058, 4
    %v1060 = vadd.f32 %v1058, %v1059
    %v1061 = vrot.slane %v1060, 2
    %v1062 = vadd.f32 %v1060, %v1061
    %v1063 = vrot.slane %v1062, 1
    %v1064 = vadd.f32 %v1062, %v1063
    %v1065 = vmul.f32 %v1057, 0.125
    %v1066 = vmul.f32 %v1064, 0.125
    %v1067 = vmul.f32 %v1065, %v1065
    %v1068 = vsub.f32 %v1066, %v1067
    %v1069 = vmax.f32 %v1068, 0.0
    %v1070 = vsub.f32 %v1045, %v1065
    %v1071 = vadd.f32 %v1069, 1e-05
    %v1072 = vrsqrt.pop %v1071
    %v1073 = vmul.f32 %v1070, %v1072
    %v1074 = vmul.f32 %v1073, %v1050
    %v1075 = vadd.f32 %v1074, %v1051
    %vm1076 = vcmp.gt.f32.partialorder %v1075, 0.0
    %v1077 = vmul.f32 %v1075, 0.2
    %v1078 = vsel %vm1076, %v1075, %v1077
    %v1079 = vpack.c.bf16 %v1078, %v1078
    %v1080 = vld [vmem:[%s2] sm:$0xff]
    %v1081 = vld [vmem:[%s2 + $0x8] sm:$0xff]
    %v1082 = vld [vmem:[%s2 + $0x10] sm:$0xff]
    %v1083 = vld [vmem:[%s2 + $0x18] sm:$0xff]
    %v1084 = vld [vmem:[%s2 + $0x20] sm:$0xff]
    %v1085 = vld [vmem:[%s2 + $0x28] sm:$0xff]
    %v1086 = vld [vmem:[%s2 + $0x30] sm:$0xff]
    %v1087 = vld [vmem:[%s2 + $0x38] sm:$0xff]
    %v1088 = vld [vmem:[%s2 + $0x40] sm:$0xff]
    %v1089 = vld [vmem:[%s2 + $0x48] sm:$0xff]
    %v1090 = vld [vmem:[%s2 + $0x50] sm:$0xff]
    %v1091 = vld [vmem:[%s2 + $0x58] sm:$0xff]
    %v1092 = vld [vmem:[%s2 + $0x60] sm:$0xff]
    %v1093 = vld [vmem:[%s2 + $0x68] sm:$0xff]
    %v1094 = vld [vmem:[%s2 + $0x70] sm:$0xff]
    %v1095 = vld [vmem:[%s2 + $0x78] sm:$0xff]
    %v1112 = vunpack.c.l.b16 %v1080
    %v1113 = vunpack.c.h.b16 %v1080
    %v1114 = vunpack.c.l.b16 %v1081
    %v1115 = vunpack.c.h.b16 %v1081
    %v1116 = vunpack.c.l.b16 %v1082
    %v1117 = vunpack.c.h.b16 %v1082
    %v1118 = vunpack.c.l.b16 %v1083
    %v1119 = vunpack.c.h.b16 %v1083
    %v1120 = vunpack.c.l.b16 %v1084
    %v1121 = vunpack.c.h.b16 %v1084
    %v1122 = vunpack.c.l.b16 %v1085
    %v1123 = vunpack.c.h.b16 %v1085
    %v1124 = vunpack.c.l.b16 %v1086
    %v1125 = vunpack.c.h.b16 %v1086
    %v1126 = vunpack.c.l.b16 %v1087
    %v1127 = vunpack.c.h.b16 %v1087
    %v1128 = vunpack.c.l.b16 %v1088
    %v1129 = vunpack.c.h.b16 %v1088
    %v1130 = vunpack.c.l.b16 %v1089
    %v1131 = vunpack.c.h.b16 %v1089
    %v1132 = vunpack.c.l.b16 %v1090
    %v1133 = vunpack.c.h.b16 %v1090
    %v1134 = vunpack.c.l.b16 %v1091
    %v1135 = vunpack.c.h.b16 %v1091
    %v1136 = vunpack.c.l.b16 %v1092
    %v1137 = vunpack.c.h.b16 %v1092
    %v1138 = vunpack.c.l.b16 %v1093
    %v1139 = vunpack.c.h.b16 %v1093
    %v1140 = vunpack.c.l.b16 %v1094
    %v1141 = vunpack.c.h.b16 %v1094
    %v1142 = vunpack.c.l.b16 %v1095
    %v1143 = vunpack.c.h.b16 %v1095
    %v1144 = vpack.c.b16 %v1114, %v1112
    %v1145 = vpack.c.b16 %v1115, %v1113
    %v1146 = vpack.c.b16 %v1118, %v1116
    %v1147 = vpack.c.b16 %v1119, %v1117
    %v1148 = vpack.c.b16 %v1122, %v1120
    %v1149 = vpack.c.b16 %v1123, %v1121
    %v1150 = vpack.c.b16 %v1126, %v1124
    %v1151 = vpack.c.b16 %v1127, %v1125
    %v1152 = vpack.c.b16 %v1130, %v1128
    %v1153 = vpack.c.b16 %v1131, %v1129
    %v1154 = vpack.c.b16 %v1134, %v1132
    %v1155 = vpack.c.b16 %v1135, %v1133
    %v1156 = vpack.c.b16 %v1138, %v1136
    %v1157 = vpack.c.b16 %v1139, %v1137
    %v1158 = vpack.c.b16 %v1142, %v1140
    %v1159 = vpack.c.b16 %v1143, %v1141
    %1176 = vmatprep.subr.bf16.mxu0 %v1145
    %1177 = vmatpush1.bf16.msra.mxu0 %v1144
    %1178 = vmatprep.subr.bf16.mxu0 %v1147
    %1179 = vmatpush1.bf16.msra.mxu0 %v1146
    %1180 = vmatprep.subr.bf16.mxu0 %v1149
    %1181 = vmatpush1.bf16.msra.mxu0 %v1148
    %1182 = vmatprep.subr.bf16.mxu0 %v1151
    %1183 = vmatpush1.bf16.msra.mxu0 %v1150
    %1184 = vmatprep.subr.bf16.mxu0 %v1153
    %1185 = vmatpush1.bf16.msra.mxu0 %v1152
    %1186 = vmatprep.subr.bf16.mxu0 %v1155
    %1187 = vmatpush1.bf16.msra.mxu0 %v1154
    %1188 = vmatprep.subr.bf16.mxu0 %v1157
    %1189 = vmatpush1.bf16.msra.mxu0 %v1156
    %1190 = vmatprep.subr.bf16.mxu0 %v1159
    %1191 = vmatpush1.bf16.msra.mxu0 %v1158
    %1192 = vmatprep.subr.bf16.mxu0 0
    %1193 = vmatpush1.bf16.msra.mxu0 0
    %1194 = vmatprep.subr.bf16.mxu0 0
    %1195 = vmatpush1.bf16.msra.mxu0 0
    %1196 = vmatprep.subr.bf16.mxu0 0
    %1197 = vmatpush1.bf16.msra.mxu0 0
    %1198 = vmatprep.subr.bf16.mxu0 0
    %1199 = vmatpush1.bf16.msra.mxu0 0
    %1200 = vmatprep.subr.bf16.mxu0 0
    %1201 = vmatpush1.bf16.msra.mxu0 0
    %1202 = vmatprep.subr.bf16.mxu0 0
    %1203 = vmatpush1.bf16.msra.mxu0 0
    %1204 = vmatprep.subr.bf16.mxu0 0
    %1205 = vmatpush1.bf16.msra.mxu0 0
    %1206 = vmatprep.subr.bf16.mxu0 0
    %1207 = vmatpush1.bf16.msra.mxu0 0
    %1208 = vmatprep.mubr.bf16.mxu0 0
    %1209 = vmatmul.mubr.bf16.gmra.mrb[0].mxu0 %v1079
    %v1210 = vpop.f32.mrb[0].mxu0
    %v1211 = vadd.f32 0.0, %v1210
    %v1212 = vpop.f32.mrb[0].mxu0
    %v1213 = vadd.f32 0.0, %v1212
    %v1214 = vpop.f32.mrb[0].mxu0
    %v1215 = vpop.f32.mrb[0].mxu0
    %1216 = vdwg.mxu0
    %s1217 = scalar_lea.vmem %s5, 2
    %v1218 = vld [vmem:[%s1217] ss:$8 sm:$0x3]
    %s1219 = scalar_lea.vmem %s5, 3
    %v1220 = vld [vmem:[%s1219] ss:$8 sm:$0x3]
    %v1221 = vrot.slane %v1211, 4
    %v1222 = vadd.f32 %v1211, %v1221
    %v1223 = vrot.slane %v1222, 2
    %v1224 = vadd.f32 %v1222, %v1223
    %v1225 = vrot.slane %v1224, 1
    %v1226 = vadd.f32 %v1224, %v1225
    %v1227 = vrot.slane %v1213, 4
    %v1228 = vadd.f32 %v1213, %v1227
    %v1229 = vrot.slane %v1228, 2
    %v1230 = vadd.f32 %v1228, %v1229
    %v1231 = vrot.slane %v1230, 1
    %v1232 = vadd.f32 %v1230, %v1231
    %v1233 = vmul.f32 %v1211, %v1211
    %v1234 = vmul.f32 %v1213, %v1213
    %v1235 = vrot.slane %v1233, 4
    %v1236 = vadd.f32 %v1233, %v1235
    %v1237 = vrot.slane %v1236, 2
    %v1238 = vadd.f32 %v1236, %v1237
    %v1239 = vrot.slane %v1238, 1
    %v1240 = vadd.f32 %v1238, %v1239
    %v1241 = vrot.slane %v1234, 4
    %v1242 = vadd.f32 %v1234, %v1241
    %v1243 = vrot.slane %v1242, 2
    %v1244 = vadd.f32 %v1242, %v1243
    %v1245 = vrot.slane %v1244, 1
    %v1246 = vadd.f32 %v1244, %v1245
    %v1247 = vmul.f32 %v1226, 0.125
    %v1248 = vmul.f32 %v1232, 0.125
    %v1249 = vmul.f32 %v1240, 0.125
    %v1250 = vmul.f32 %v1246, 0.125
    %v1251 = vmul.f32 %v1247, %v1247
    %v1252 = vmul.f32 %v1248, %v1248
    %v1253 = vsub.f32 %v1249, %v1251
    %v1254 = vsub.f32 %v1250, %v1252
    %v1255 = vmax.f32 %v1253, 0.0
    %v1256 = vmax.f32 %v1254, 0.0
    %v1257 = vsub.f32 %v1211, %v1247
    %v1258 = vsub.f32 %v1213, %v1248
    %v1259 = vadd.f32 %v1255, 1e-05
    %v1260 = vadd.f32 %v1256, 1e-05
    %v1261 = vrsqrt.pop %v1259
    %v1262 = vrsqrt.pop %v1260
    %v1263 = vmul.f32 %v1257, %v1261
    %v1264 = vmul.f32 %v1258, %v1262
    %v1266 = vlaneseq
    %v1267 = vshrl.u32 %v1266, 7
    %v1268 = vsub.s32 0, %v1267
    %v1269 = vrot.slane %v1218, %v1268
    %v1270 = vlaneseq
    %v1271 = vshrl.u32 %v1270, 7
    %v1272 = vsub.s32 1, %v1271
    %v1273 = vrot.slane %v1218, %v1272
    %v1276 = vmul.f32 %v1263, %v1269
    %v1277 = vmul.f32 %v1264, %v1273
    %v1279 = vlaneseq
    %v1280 = vshrl.u32 %v1279, 7
    %v1281 = vsub.s32 0, %v1280
    %v1282 = vrot.slane %v1220, %v1281
    %v1283 = vlaneseq
    %v1284 = vshrl.u32 %v1283, 7
    %v1285 = vsub.s32 1, %v1284
    %v1286 = vrot.slane %v1220, %v1285
    %v1289 = vadd.f32 %v1276, %v1282
    %v1290 = vadd.f32 %v1277, %v1286
    %vm1291 = vcmp.gt.f32.partialorder %v1289, 0.0
    %vm1292 = vcmp.gt.f32.partialorder %v1290, 0.0
    %v1293 = vmul.f32 %v1289, 0.2
    %v1294 = vmul.f32 %v1290, 0.2
    %v1295 = vsel %vm1291, %v1289, %v1293
    %v1296 = vsel %vm1292, %v1290, %v1294
    %v1297 = vpack.c.bf16 %v1295, %v1295
    %v1298 = vpack.c.bf16 %v1296, %v1296
    %v1299 = vld [vmem:[%s3] sm:$0xff]
    %v1300 = vld [vmem:[%s3 + $0x8] sm:$0xff]
    %v1301 = vld [vmem:[%s3 + $0x10] sm:$0xff]
    %v1302 = vld [vmem:[%s3 + $0x18] sm:$0xff]
    %v1303 = vld [vmem:[%s3 + $0x20] sm:$0xff]
    %v1304 = vld [vmem:[%s3 + $0x28] sm:$0xff]
    %v1305 = vld [vmem:[%s3 + $0x30] sm:$0xff]
    %v1306 = vld [vmem:[%s3 + $0x38] sm:$0xff]
    %v1307 = vld [vmem:[%s3 + $0x40] sm:$0xff]
    %v1308 = vld [vmem:[%s3 + $0x48] sm:$0xff]
    %v1309 = vld [vmem:[%s3 + $0x50] sm:$0xff]
    %v1310 = vld [vmem:[%s3 + $0x58] sm:$0xff]
    %v1311 = vld [vmem:[%s3 + $0x60] sm:$0xff]
    %v1312 = vld [vmem:[%s3 + $0x68] sm:$0xff]
    %v1313 = vld [vmem:[%s3 + $0x70] sm:$0xff]
    %v1314 = vld [vmem:[%s3 + $0x78] sm:$0xff]
    %v1315 = vld [vmem:[%s3 + $0x80] sm:$0xff]
    %v1316 = vld [vmem:[%s3 + $0x88] sm:$0xff]
    %v1317 = vld [vmem:[%s3 + $0x90] sm:$0xff]
    %v1318 = vld [vmem:[%s3 + $0x98] sm:$0xff]
    %v1319 = vld [vmem:[%s3 + $0xa0] sm:$0xff]
    %v1320 = vld [vmem:[%s3 + $0xa8] sm:$0xff]
    %v1321 = vld [vmem:[%s3 + $0xb0] sm:$0xff]
    %v1322 = vld [vmem:[%s3 + $0xb8] sm:$0xff]
    %v1323 = vld [vmem:[%s3 + $0xc0] sm:$0xff]
    %v1324 = vld [vmem:[%s3 + $0xc8] sm:$0xff]
    %v1325 = vld [vmem:[%s3 + $0xd0] sm:$0xff]
    %v1326 = vld [vmem:[%s3 + $0xd8] sm:$0xff]
    %v1327 = vld [vmem:[%s3 + $0xe0] sm:$0xff]
    %v1328 = vld [vmem:[%s3 + $0xe8] sm:$0xff]
    %v1329 = vld [vmem:[%s3 + $0xf0] sm:$0xff]
    %v1330 = vld [vmem:[%s3 + $0xf8] sm:$0xff]
    %v1363 = vunpack.c.l.b16 %v1299
    %v1364 = vunpack.c.h.b16 %v1299
    %v1365 = vunpack.c.l.b16 %v1300
    %v1366 = vunpack.c.h.b16 %v1300
    %v1367 = vunpack.c.l.b16 %v1301
    %v1368 = vunpack.c.h.b16 %v1301
    %v1369 = vunpack.c.l.b16 %v1302
    %v1370 = vunpack.c.h.b16 %v1302
    %v1371 = vunpack.c.l.b16 %v1303
    %v1372 = vunpack.c.h.b16 %v1303
    %v1373 = vunpack.c.l.b16 %v1304
    %v1374 = vunpack.c.h.b16 %v1304
    %v1375 = vunpack.c.l.b16 %v1305
    %v1376 = vunpack.c.h.b16 %v1305
    %v1377 = vunpack.c.l.b16 %v1306
    %v1378 = vunpack.c.h.b16 %v1306
    %v1379 = vunpack.c.l.b16 %v1307
    %v1380 = vunpack.c.h.b16 %v1307
    %v1381 = vunpack.c.l.b16 %v1308
    %v1382 = vunpack.c.h.b16 %v1308
    %v1383 = vunpack.c.l.b16 %v1309
    %v1384 = vunpack.c.h.b16 %v1309
    %v1385 = vunpack.c.l.b16 %v1310
    %v1386 = vunpack.c.h.b16 %v1310
    %v1387 = vunpack.c.l.b16 %v1311
    %v1388 = vunpack.c.h.b16 %v1311
    %v1389 = vunpack.c.l.b16 %v1312
    %v1390 = vunpack.c.h.b16 %v1312
    %v1391 = vunpack.c.l.b16 %v1313
    %v1392 = vunpack.c.h.b16 %v1313
    %v1393 = vunpack.c.l.b16 %v1314
    %v1394 = vunpack.c.h.b16 %v1314
    %v1395 = vunpack.c.l.b16 %v1315
    %v1396 = vunpack.c.h.b16 %v1315
    %v1397 = vunpack.c.l.b16 %v1316
    %v1398 = vunpack.c.h.b16 %v1316
    %v1399 = vunpack.c.l.b16 %v1317
    %v1400 = vunpack.c.h.b16 %v1317
    %v1401 = vunpack.c.l.b16 %v1318
    %v1402 = vunpack.c.h.b16 %v1318
    %v1403 = vunpack.c.l.b16 %v1319
    %v1404 = vunpack.c.h.b16 %v1319
    %v1405 = vunpack.c.l.b16 %v1320
    %v1406 = vunpack.c.h.b16 %v1320
    %v1407 = vunpack.c.l.b16 %v1321
    %v1408 = vunpack.c.h.b16 %v1321
    %v1409 = vunpack.c.l.b16 %v1322
    %v1410 = vunpack.c.h.b16 %v1322
    %v1411 = vunpack.c.l.b16 %v1323
    %v1412 = vunpack.c.h.b16 %v1323
    %v1413 = vunpack.c.l.b16 %v1324
    %v1414 = vunpack.c.h.b16 %v1324
    %v1415 = vunpack.c.l.b16 %v1325
    %v1416 = vunpack.c.h.b16 %v1325
    %v1417 = vunpack.c.l.b16 %v1326
    %v1418 = vunpack.c.h.b16 %v1326
    %v1419 = vunpack.c.l.b16 %v1327
    %v1420 = vunpack.c.h.b16 %v1327
    %v1421 = vunpack.c.l.b16 %v1328
    %v1422 = vunpack.c.h.b16 %v1328
    %v1423 = vunpack.c.l.b16 %v1329
    %v1424 = vunpack.c.h.b16 %v1329
    %v1425 = vunpack.c.l.b16 %v1330
    %v1426 = vunpack.c.h.b16 %v1330
    %v1427 = vpack.c.b16 %v1365, %v1363
    %v1428 = vpack.c.b16 %v1366, %v1364
    %v1429 = vpack.c.b16 %v1369, %v1367
    %v1430 = vpack.c.b16 %v1370, %v1368
    %v1431 = vpack.c.b16 %v1373, %v1371
    %v1432 = vpack.c.b16 %v1374, %v1372
    %v1433 = vpack.c.b16 %v1377, %v1375
    %v1434 = vpack.c.b16 %v1378, %v1376
    %v1435 = vpack.c.b16 %v1381, %v1379
    %v1436 = vpack.c.b16 %v1382, %v1380
    %v1437 = vpack.c.b16 %v1385, %v1383
    %v1438 = vpack.c.b16 %v1386, %v1384
    %v1439 = vpack.c.b16 %v1389, %v1387
    %v1440 = vpack.c.b16 %v1390, %v1388
    %v1441 = vpack.c.b16 %v1393, %v1391
    %v1442 = vpack.c.b16 %v1394, %v1392
    %v1443 = vpack.c.b16 %v1397, %v1395
    %v1444 = vpack.c.b16 %v1398, %v1396
    %v1445 = vpack.c.b16 %v1401, %v1399
    %v1446 = vpack.c.b16 %v1402, %v1400
    %v1447 = vpack.c.b16 %v1405, %v1403
    %v1448 = vpack.c.b16 %v1406, %v1404
    %v1449 = vpack.c.b16 %v1409, %v1407
    %v1450 = vpack.c.b16 %v1410, %v1408
    %v1451 = vpack.c.b16 %v1413, %v1411
    %v1452 = vpack.c.b16 %v1414, %v1412
    %v1453 = vpack.c.b16 %v1417, %v1415
    %v1454 = vpack.c.b16 %v1418, %v1416
    %v1455 = vpack.c.b16 %v1421, %v1419
    %v1456 = vpack.c.b16 %v1422, %v1420
    %v1457 = vpack.c.b16 %v1425, %v1423
    %v1458 = vpack.c.b16 %v1426, %v1424
    %1491 = vmatprep.subr.bf16.mxu0 %v1428
    %1492 = vmatpush1.bf16.msra.mxu0 %v1427
    %1493 = vmatprep.subr.bf16.mxu0 %v1430
    %1494 = vmatpush1.bf16.msra.mxu0 %v1429
    %1495 = vmatprep.subr.bf16.mxu0 %v1432
    %1496 = vmatpush1.bf16.msra.mxu0 %v1431
    %1497 = vmatprep.subr.bf16.mxu0 %v1434
    %1498 = vmatpush1.bf16.msra.mxu0 %v1433
    %1499 = vmatprep.subr.bf16.mxu0 %v1436
    %1500 = vmatpush1.bf16.msra.mxu0 %v1435
    %1501 = vmatprep.subr.bf16.mxu0 %v1438
    %1502 = vmatpush1.bf16.msra.mxu0 %v1437
    %1503 = vmatprep.subr.bf16.mxu0 %v1440
    %1504 = vmatpush1.bf16.msra.mxu0 %v1439
    %1505 = vmatprep.subr.bf16.mxu0 %v1442
    %1506 = vmatpush1.bf16.msra.mxu0 %v1441
    %1507 = vmatprep.subr.bf16.mxu0 %v1444
    %1508 = vmatpush1.bf16.msra.mxu0 %v1443
    %1509 = vmatprep.subr.bf16.mxu0 %v1446
    %1510 = vmatpush1.bf16.msra.mxu0 %v1445
    %1511 = vmatprep.subr.bf16.mxu0 %v1448
    %1512 = vmatpush1.bf16.msra.mxu0 %v1447
    %1513 = vmatprep.subr.bf16.mxu0 %v1450
    %1514 = vmatpush1.bf16.msra.mxu0 %v1449
    %1515 = vmatprep.subr.bf16.mxu0 %v1452
    %1516 = vmatpush1.bf16.msra.mxu0 %v1451
    %1517 = vmatprep.subr.bf16.mxu0 %v1454
    %1518 = vmatpush1.bf16.msra.mxu0 %v1453
    %1519 = vmatprep.subr.bf16.mxu0 %v1456
    %1520 = vmatpush1.bf16.msra.mxu0 %v1455
    %1521 = vmatprep.subr.bf16.mxu0 %v1458
    %1522 = vmatpush1.bf16.msra.mxu0 %v1457
    %1523 = vmatprep.mubr.bf16.mxu0 %v1298
    %1524 = vmatmul.mubr.bf16.gmra.mrb[0].mxu0 %v1297
    %v1525 = vpop.f32.mrb[0].mxu0
    %v1526 = vadd.f32 0.0, %v1525
    %v1527 = vpop.f32.mrb[0].mxu0
    %v1528 = vadd.f32 0.0, %v1527
    %v1529 = vpop.f32.mrb[0].mxu0
    %v1530 = vpop.f32.mrb[0].mxu0
    %1531 = vdwg.mxu0
    %s1532 = scalar_lea.vmem %s5, 4
    %v1533 = vld [vmem:[%s1532] ss:$8 sm:$0x3]
    %s1534 = scalar_lea.vmem %s5, 5
    %v1535 = vld [vmem:[%s1534] ss:$8 sm:$0x3]
    %v1536 = vrot.slane %v1526, 4
    %v1537 = vadd.f32 %v1526, %v1536
    %v1538 = vrot.slane %v1537, 2
    %v1539 = vadd.f32 %v1537, %v1538
    %v1540 = vrot.slane %v1539, 1
    %v1541 = vadd.f32 %v1539, %v1540
    %v1542 = vrot.slane %v1528, 4
    %v1543 = vadd.f32 %v1528, %v1542
    %v1544 = vrot.slane %v1543, 2
    %v1545 = vadd.f32 %v1543, %v1544
    %v1546 = vrot.slane %v1545, 1
    %v1547 = vadd.f32 %v1545, %v1546
    %v1548 = vmul.f32 %v1526, %v1526
    %v1549 = vmul.f32 %v1528, %v1528
    %v1550 = vrot.slane %v1548, 4
    %v1551 = vadd.f32 %v1548, %v1550
    %v1552 = vrot.slane %v1551, 2
    %v1553 = vadd.f32 %v1551, %v1552
    %v1554 = vrot.slane %v1553, 1
    %v1555 = vadd.f32 %v1553, %v1554
    %v1556 = vrot.slane %v1549, 4
    %v1557 = vadd.f32 %v1549, %v1556
    %v1558 = vrot.slane %v1557, 2
    %v1559 = vadd.f32 %v1557, %v1558
    %v1560 = vrot.slane %v1559, 1
    %v1561 = vadd.f32 %v1559, %v1560
    %v1562 = vmul.f32 %v1541, 0.125
    %v1563 = vmul.f32 %v1547, 0.125
    %v1564 = vmul.f32 %v1555, 0.125
    %v1565 = vmul.f32 %v1561, 0.125
    %v1566 = vmul.f32 %v1562, %v1562
    %v1567 = vmul.f32 %v1563, %v1563
    %v1568 = vsub.f32 %v1564, %v1566
    %v1569 = vsub.f32 %v1565, %v1567
    %v1570 = vmax.f32 %v1568, 0.0
    %v1571 = vmax.f32 %v1569, 0.0
    %v1572 = vsub.f32 %v1526, %v1562
    %v1573 = vsub.f32 %v1528, %v1563
    %v1574 = vadd.f32 %v1570, 1e-05
    %v1575 = vadd.f32 %v1571, 1e-05
    %v1576 = vrsqrt.pop %v1574
    %v1577 = vrsqrt.pop %v1575
    %v1578 = vmul.f32 %v1572, %v1576
    %v1579 = vmul.f32 %v1573, %v1577
    %v1581 = vlaneseq
    %v1582 = vshrl.u32 %v1581, 7
    %v1583 = vsub.s32 0, %v1582
    %v1584 = vrot.slane %v1533, %v1583
    %v1585 = vlaneseq
    %v1586 = vshrl.u32 %v1585, 7
    %v1587 = vsub.s32 1, %v1586
    %v1588 = vrot.slane %v1533, %v1587
    %v1591 = vmul.f32 %v1578, %v1584
    %v1592 = vmul.f32 %v1579, %v1588
    %v1594 = vlaneseq
    %v1595 = vshrl.u32 %v1594, 7
    %v1596 = vsub.s32 0, %v1595
    %v1597 = vrot.slane %v1535, %v1596
    %v1598 = vlaneseq
    %v1599 = vshrl.u32 %v1598, 7
    %v1600 = vsub.s32 1, %v1599
    %v1601 = vrot.slane %v1535, %v1600
    %v1604 = vadd.f32 %v1591, %v1597
    %v1605 = vadd.f32 %v1592, %v1601
    %vm1606 = vcmp.gt.f32.partialorder %v1604, 0.0
    %vm1607 = vcmp.gt.f32.partialorder %v1605, 0.0
    %v1608 = vmul.f32 %v1604, 0.2
    %v1609 = vmul.f32 %v1605, 0.2
    %v1610 = vsel %vm1606, %v1604, %v1608
    %v1611 = vsel %vm1607, %v1605, %v1609
    %v1612 = vpack.c.bf16 %v1610, %v1610
    %v1613 = vpack.c.bf16 %v1611, %v1611
    %v1614 = vld [vmem:[%s4] sm:$0xff]
    %v1615 = vld [vmem:[%s4 + $0x8] sm:$0xff]
    %v1616 = vld [vmem:[%s4 + $0x10] sm:$0xff]
    %v1617 = vld [vmem:[%s4 + $0x18] sm:$0xff]
    %v1618 = vld [vmem:[%s4 + $0x20] sm:$0xff]
    %v1619 = vld [vmem:[%s4 + $0x28] sm:$0xff]
    %v1620 = vld [vmem:[%s4 + $0x30] sm:$0xff]
    %v1621 = vld [vmem:[%s4 + $0x38] sm:$0xff]
    %v1622 = vld [vmem:[%s4 + $0x40] sm:$0xff]
    %v1623 = vld [vmem:[%s4 + $0x48] sm:$0xff]
    %v1624 = vld [vmem:[%s4 + $0x50] sm:$0xff]
    %v1625 = vld [vmem:[%s4 + $0x58] sm:$0xff]
    %v1626 = vld [vmem:[%s4 + $0x60] sm:$0xff]
    %v1627 = vld [vmem:[%s4 + $0x68] sm:$0xff]
    %v1628 = vld [vmem:[%s4 + $0x70] sm:$0xff]
    %v1629 = vld [vmem:[%s4 + $0x78] sm:$0xff]
    %v1630 = vld [vmem:[%s4 + $0x80] sm:$0xff]
    %v1631 = vld [vmem:[%s4 + $0x88] sm:$0xff]
    %v1632 = vld [vmem:[%s4 + $0x90] sm:$0xff]
    %v1633 = vld [vmem:[%s4 + $0x98] sm:$0xff]
    %v1634 = vld [vmem:[%s4 + $0xa0] sm:$0xff]
    %v1635 = vld [vmem:[%s4 + $0xa8] sm:$0xff]
    %v1636 = vld [vmem:[%s4 + $0xb0] sm:$0xff]
    %v1637 = vld [vmem:[%s4 + $0xb8] sm:$0xff]
    %v1638 = vld [vmem:[%s4 + $0xc0] sm:$0xff]
    %v1639 = vld [vmem:[%s4 + $0xc8] sm:$0xff]
    %v1640 = vld [vmem:[%s4 + $0xd0] sm:$0xff]
    %v1641 = vld [vmem:[%s4 + $0xd8] sm:$0xff]
    %v1642 = vld [vmem:[%s4 + $0xe0] sm:$0xff]
    %v1643 = vld [vmem:[%s4 + $0xe8] sm:$0xff]
    %v1644 = vld [vmem:[%s4 + $0xf0] sm:$0xff]
    %v1645 = vld [vmem:[%s4 + $0xf8] sm:$0xff]
    %v1678 = vunpack.c.l.b16 %v1614
    %v1679 = vunpack.c.h.b16 %v1614
    %v1680 = vunpack.c.l.b16 %v1615
    %v1681 = vunpack.c.h.b16 %v1615
    %v1682 = vunpack.c.l.b16 %v1616
    %v1683 = vunpack.c.h.b16 %v1616
    %v1684 = vunpack.c.l.b16 %v1617
    %v1685 = vunpack.c.h.b16 %v1617
    %v1686 = vunpack.c.l.b16 %v1618
    %v1687 = vunpack.c.h.b16 %v1618
    %v1688 = vunpack.c.l.b16 %v1619
    %v1689 = vunpack.c.h.b16 %v1619
    %v1690 = vunpack.c.l.b16 %v1620
    %v1691 = vunpack.c.h.b16 %v1620
    %v1692 = vunpack.c.l.b16 %v1621
    %v1693 = vunpack.c.h.b16 %v1621
    %v1694 = vunpack.c.l.b16 %v1622
    %v1695 = vunpack.c.h.b16 %v1622
    %v1696 = vunpack.c.l.b16 %v1623
    %v1697 = vunpack.c.h.b16 %v1623
    %v1698 = vunpack.c.l.b16 %v1624
    %v1699 = vunpack.c.h.b16 %v1624
    %v1700 = vunpack.c.l.b16 %v1625
    %v1701 = vunpack.c.h.b16 %v1625
    %v1702 = vunpack.c.l.b16 %v1626
    %v1703 = vunpack.c.h.b16 %v1626
    %v1704 = vunpack.c.l.b16 %v1627
    %v1705 = vunpack.c.h.b16 %v1627
    %v1706 = vunpack.c.l.b16 %v1628
    %v1707 = vunpack.c.h.b16 %v1628
    %v1708 = vunpack.c.l.b16 %v1629
    %v1709 = vunpack.c.h.b16 %v1629
    %v1710 = vunpack.c.l.b16 %v1630
    %v1711 = vunpack.c.h.b16 %v1630
    %v1712 = vunpack.c.l.b16 %v1631
    %v1713 = vunpack.c.h.b16 %v1631
    %v1714 = vunpack.c.l.b16 %v1632
    %v1715 = vunpack.c.h.b16 %v1632
    %v1716 = vunpack.c.l.b16 %v1633
    %v1717 = vunpack.c.h.b16 %v1633
    %v1718 = vunpack.c.l.b16 %v1634
    %v1719 = vunpack.c.h.b16 %v1634
    %v1720 = vunpack.c.l.b16 %v1635
    %v1721 = vunpack.c.h.b16 %v1635
    %v1722 = vunpack.c.l.b16 %v1636
    %v1723 = vunpack.c.h.b16 %v1636
    %v1724 = vunpack.c.l.b16 %v1637
    %v1725 = vunpack.c.h.b16 %v1637
    %v1726 = vunpack.c.l.b16 %v1638
    %v1727 = vunpack.c.h.b16 %v1638
    %v1728 = vunpack.c.l.b16 %v1639
    %v1729 = vunpack.c.h.b16 %v1639
    %v1730 = vunpack.c.l.b16 %v1640
    %v1731 = vunpack.c.h.b16 %v1640
    %v1732 = vunpack.c.l.b16 %v1641
    %v1733 = vunpack.c.h.b16 %v1641
    %v1734 = vunpack.c.l.b16 %v1642
    %v1735 = vunpack.c.h.b16 %v1642
    %v1736 = vunpack.c.l.b16 %v1643
    %v1737 = vunpack.c.h.b16 %v1643
    %v1738 = vunpack.c.l.b16 %v1644
    %v1739 = vunpack.c.h.b16 %v1644
    %v1740 = vunpack.c.l.b16 %v1645
    %v1741 = vunpack.c.h.b16 %v1645
    %v1742 = vpack.c.b16 %v1680, %v1678
    %v1743 = vpack.c.b16 %v1681, %v1679
    %v1744 = vpack.c.b16 %v1684, %v1682
    %v1745 = vpack.c.b16 %v1685, %v1683
    %v1746 = vpack.c.b16 %v1688, %v1686
    %v1747 = vpack.c.b16 %v1689, %v1687
    %v1748 = vpack.c.b16 %v1692, %v1690
    %v1749 = vpack.c.b16 %v1693, %v1691
    %v1750 = vpack.c.b16 %v1696, %v1694
    %v1751 = vpack.c.b16 %v1697, %v1695
    %v1752 = vpack.c.b16 %v1700, %v1698
    %v1753 = vpack.c.b16 %v1701, %v1699
    %v1754 = vpack.c.b16 %v1704, %v1702
    %v1755 = vpack.c.b16 %v1705, %v1703
    %v1756 = vpack.c.b16 %v1708, %v1706
    %v1757 = vpack.c.b16 %v1709, %v1707
    %v1758 = vpack.c.b16 %v1712, %v1710
    %v1759 = vpack.c.b16 %v1713, %v1711
    %v1760 = vpack.c.b16 %v1716, %v1714
    %v1761 = vpack.c.b16 %v1717, %v1715
    %v1762 = vpack.c.b16 %v1720, %v1718
    %v1763 = vpack.c.b16 %v1721, %v1719
    %v1764 = vpack.c.b16 %v1724, %v1722
    %v1765 = vpack.c.b16 %v1725, %v1723
    %v1766 = vpack.c.b16 %v1728, %v1726
    %v1767 = vpack.c.b16 %v1729, %v1727
    %v1768 = vpack.c.b16 %v1732, %v1730
    %v1769 = vpack.c.b16 %v1733, %v1731
    %v1770 = vpack.c.b16 %v1736, %v1734
    %v1771 = vpack.c.b16 %v1737, %v1735
    %v1772 = vpack.c.b16 %v1740, %v1738
    %v1773 = vpack.c.b16 %v1741, %v1739
    %1806 = vmatprep.subr.bf16.mxu0 %v1743
    %1807 = vmatpush1.bf16.msra.mxu0 %v1742
    %1808 = vmatprep.subr.bf16.mxu0 %v1745
    %1809 = vmatpush1.bf16.msra.mxu0 %v1744
    %1810 = vmatprep.subr.bf16.mxu0 %v1747
    %1811 = vmatpush1.bf16.msra.mxu0 %v1746
    %1812 = vmatprep.subr.bf16.mxu0 %v1749
    %1813 = vmatpush1.bf16.msra.mxu0 %v1748
    %1814 = vmatprep.subr.bf16.mxu0 %v1751
    %1815 = vmatpush1.bf16.msra.mxu0 %v1750
    %1816 = vmatprep.subr.bf16.mxu0 %v1753
    %1817 = vmatpush1.bf16.msra.mxu0 %v1752
    %1818 = vmatprep.subr.bf16.mxu0 %v1755
    %1819 = vmatpush1.bf16.msra.mxu0 %v1754
    %1820 = vmatprep.subr.bf16.mxu0 %v1757
    %1821 = vmatpush1.bf16.msra.mxu0 %v1756
    %1822 = vmatprep.subr.bf16.mxu0 %v1759
    %1823 = vmatpush1.bf16.msra.mxu0 %v1758
    %1824 = vmatprep.subr.bf16.mxu0 %v1761
    %1825 = vmatpush1.bf16.msra.mxu0 %v1760
    %1826 = vmatprep.subr.bf16.mxu0 %v1763
    %1827 = vmatpush1.bf16.msra.mxu0 %v1762
    %1828 = vmatprep.subr.bf16.mxu0 %v1765
    %1829 = vmatpush1.bf16.msra.mxu0 %v1764
    %1830 = vmatprep.subr.bf16.mxu0 %v1767
    %1831 = vmatpush1.bf16.msra.mxu0 %v1766
    %1832 = vmatprep.subr.bf16.mxu0 %v1769
    %1833 = vmatpush1.bf16.msra.mxu0 %v1768
    %1834 = vmatprep.subr.bf16.mxu0 %v1771
    %1835 = vmatpush1.bf16.msra.mxu0 %v1770
    %1836 = vmatprep.subr.bf16.mxu0 %v1773
    %1837 = vmatpush1.bf16.msra.mxu0 %v1772
    %1838 = vmatprep.mubr.bf16.mxu0 %v1613
    %1839 = vmatmul.mubr.bf16.gmra.mrb[0].mxu0 %v1612
    %v1840 = vpop.f32.mrb[0].mxu0
    %v1841 = vadd.f32 0.0, %v1840
    %v1842 = vpop.f32.mrb[0].mxu0
    %v1843 = vadd.f32 0.0, %v1842
    %v1844 = vpop.f32.mrb[0].mxu0
    %v1845 = vpop.f32.mrb[0].mxu0
    %1846 = vdwg.mxu0
    %s1847 = scalar_lea.vmem %s5, 6
    %v1848 = vld [vmem:[%s1847] ss:$8 sm:$0x3]
    %s1849 = scalar_lea.vmem %s5, 7
    %v1850 = vld [vmem:[%s1849] ss:$8 sm:$0x3]
    %v1851 = vrot.slane %v1841, 4
    %v1852 = vadd.f32 %v1841, %v1851
    %v1853 = vrot.slane %v1852, 2
    %v1854 = vadd.f32 %v1852, %v1853
    %v1855 = vrot.slane %v1854, 1
    %v1856 = vadd.f32 %v1854, %v1855
    %v1857 = vrot.slane %v1843, 4
    %v1858 = vadd.f32 %v1843, %v1857
    %v1859 = vrot.slane %v1858, 2
    %v1860 = vadd.f32 %v1858, %v1859
    %v1861 = vrot.slane %v1860, 1
    %v1862 = vadd.f32 %v1860, %v1861
    %v1863 = vmul.f32 %v1841, %v1841
    %v1864 = vmul.f32 %v1843, %v1843
    %v1865 = vrot.slane %v1863, 4
    %v1866 = vadd.f32 %v1863, %v1865
    %v1867 = vrot.slane %v1866, 2
    %v1868 = vadd.f32 %v1866, %v1867
    %v1869 = vrot.slane %v1868, 1
    %v1870 = vadd.f32 %v1868, %v1869
    %v1871 = vrot.slane %v1864, 4
    %v1872 = vadd.f32 %v1864, %v1871
    %v1873 = vrot.slane %v1872, 2
    %v1874 = vadd.f32 %v1872, %v1873
    %v1875 = vrot.slane %v1874, 1
    %v1876 = vadd.f32 %v1874, %v1875
    %v1877 = vmul.f32 %v1856, 0.125
    %v1878 = vmul.f32 %v1862, 0.125
    %v1879 = vmul.f32 %v1870, 0.125
    %v1880 = vmul.f32 %v1876, 0.125
    %v1881 = vmul.f32 %v1877, %v1877
    %v1882 = vmul.f32 %v1878, %v1878
    %v1883 = vsub.f32 %v1879, %v1881
    %v1884 = vsub.f32 %v1880, %v1882
    %v1885 = vmax.f32 %v1883, 0.0
    %v1886 = vmax.f32 %v1884, 0.0
    %v1887 = vsub.f32 %v1841, %v1877
    %v1888 = vsub.f32 %v1843, %v1878
    %v1889 = vadd.f32 %v1885, 1e-05
    %v1890 = vadd.f32 %v1886, 1e-05
    %v1891 = vrsqrt.pop %v1889
    %v1892 = vrsqrt.pop %v1890
    %v1893 = vmul.f32 %v1887, %v1891
    %v1894 = vmul.f32 %v1888, %v1892
    %v1896 = vlaneseq
    %v1897 = vshrl.u32 %v1896, 7
    %v1898 = vsub.s32 0, %v1897
    %v1899 = vrot.slane %v1848, %v1898
    %v1900 = vlaneseq
    %v1901 = vshrl.u32 %v1900, 7
    %v1902 = vsub.s32 1, %v1901
    %v1903 = vrot.slane %v1848, %v1902
    %v1906 = vmul.f32 %v1893, %v1899
    %v1907 = vmul.f32 %v1894, %v1903
    %v1909 = vlaneseq
    %v1910 = vshrl.u32 %v1909, 7
    %v1911 = vsub.s32 0, %v1910
    %v1912 = vrot.slane %v1850, %v1911
    %v1913 = vlaneseq
    %v1914 = vshrl.u32 %v1913, 7
    %v1915 = vsub.s32 1, %v1914
    %v1916 = vrot.slane %v1850, %v1915
    %v1919 = vadd.f32 %v1906, %v1912
    %v1920 = vadd.f32 %v1907, %v1916
    %vm1921 = vcmp.gt.f32.partialorder %v1919, 0.0
    %vm1922 = vcmp.gt.f32.partialorder %v1920, 0.0
    %v1923 = vmul.f32 %v1919, 0.2
    %v1924 = vmul.f32 %v1920, 0.2
    %v1925 = vsel %vm1921, %v1919, %v1923
    %v1926 = vsel %vm1922, %v1920, %v1924
    %s1927 = smul.u32 4, 32
    %s1928 = smul.u32 %s1927, 7
    %s1929 = sshll.u32 %s1928, 4
    %1930 = dma.done [#allocation3], %s1929
    %v1931 = vpack.c.bf16 %v1925, %v1925
    %v1932 = vpack.c.bf16 %v1926, %v1926
    %v1933 = vld [vmem:[#allocation2] sm:$0xff]
    %v1934 = vld [vmem:[#allocation2 + $0x8] sm:$0xff]
    %v1935 = vld [vmem:[#allocation2 + $0x10] sm:$0xff]
    %v1936 = vld [vmem:[#allocation2 + $0x18] sm:$0xff]
    %v1937 = vld [vmem:[#allocation2 + $0x20] sm:$0xff]
    %v1938 = vld [vmem:[#allocation2 + $0x28] sm:$0xff]
    %v1939 = vld [vmem:[#allocation2 + $0x30] sm:$0xff]
    %v1940 = vld [vmem:[#allocation2 + $0x38] sm:$0xff]
    %v1941 = vld [vmem:[#allocation2 + $0x40] sm:$0xff]
    %v1942 = vld [vmem:[#allocation2 + $0x48] sm:$0xff]
    %v1943 = vld [vmem:[#allocation2 + $0x50] sm:$0xff]
    %v1944 = vld [vmem:[#allocation2 + $0x58] sm:$0xff]
    %v1945 = vld [vmem:[#allocation2 + $0x60] sm:$0xff]
    %v1946 = vld [vmem:[#allocation2 + $0x68] sm:$0xff]
    %v1947 = vld [vmem:[#allocation2 + $0x70] sm:$0xff]
    %v1948 = vld [vmem:[#allocation2 + $0x78] sm:$0xff]
    %v1949 = vld [vmem:[#allocation2 + $0x80] sm:$0xff]
    %v1950 = vld [vmem:[#allocation2 + $0x88] sm:$0xff]
    %v1951 = vld [vmem:[#allocation2 + $0x90] sm:$0xff]
    %v1952 = vld [vmem:[#allocation2 + $0x98] sm:$0xff]
    %v1953 = vld [vmem:[#allocation2 + $0xa0] sm:$0xff]
    %v1954 = vld [vmem:[#allocation2 + $0xa8] sm:$0xff]
    %v1955 = vld [vmem:[#allocation2 + $0xb0] sm:$0xff]
    %v1956 = vld [vmem:[#allocation2 + $0xb8] sm:$0xff]
    %v1957 = vld [vmem:[#allocation2 + $0xc0] sm:$0xff]
    %v1958 = vld [vmem:[#allocation2 + $0xc8] sm:$0xff]
    %v1959 = vld [vmem:[#allocation2 + $0xd0] sm:$0xff]
    %v1960 = vld [vmem:[#allocation2 + $0xd8] sm:$0xff]
    %v1961 = vld [vmem:[#allocation2 + $0xe0] sm:$0xff]
    %v1962 = vld [vmem:[#allocation2 + $0xe8] sm:$0xff]
    %v1963 = vld [vmem:[#allocation2 + $0xf0] sm:$0xff]
    %v1964 = vld [vmem:[#allocation2 + $0xf8] sm:$0xff]
    %v1965 = vld [vmem:[#allocation2 + $0x100] sm:$0xff]
    %v1966 = vld [vmem:[#allocation2 + $0x108] sm:$0xff]
    %v1967 = vld [vmem:[#allocation2 + $0x110] sm:$0xff]
    %v1968 = vld [vmem:[#allocation2 + $0x118] sm:$0xff]
    %v1969 = vld [vmem:[#allocation2 + $0x120] sm:$0xff]
    %v1970 = vld [vmem:[#allocation2 + $0x128] sm:$0xff]
    %v1971 = vld [vmem:[#allocation2 + $0x130] sm:$0xff]
    %v1972 = vld [vmem:[#allocation2 + $0x138] sm:$0xff]
    %v1973 = vld [vmem:[#allocation2 + $0x140] sm:$0xff]
    %v1974 = vld [vmem:[#allocation2 + $0x148] sm:$0xff]
    %v1975 = vld [vmem:[#allocation2 + $0x150] sm:$0xff]
    %v1976 = vld [vmem:[#allocation2 + $0x158] sm:$0xff]
    %v1977 = vld [vmem:[#allocation2 + $0x160] sm:$0xff]
    %v1978 = vld [vmem:[#allocation2 + $0x168] sm:$0xff]
    %v1979 = vld [vmem:[#allocation2 + $0x170] sm:$0xff]
    %v1980 = vld [vmem:[#allocation2 + $0x178] sm:$0xff]
    %v1981 = vld [vmem:[#allocation2 + $0x180] sm:$0xff]
    %v1982 = vld [vmem:[#allocation2 + $0x188] sm:$0xff]
    %v1983 = vld [vmem:[#allocation2 + $0x190] sm:$0xff]
    %v1984 = vld [vmem:[#allocation2 + $0x198] sm:$0xff]
    %v1985 = vld [vmem:[#allocation2 + $0x1a0] sm:$0xff]
    %v1986 = vld [vmem:[#allocation2 + $0x1a8] sm:$0xff]
    %v1987 = vld [vmem:[#allocation2 + $0x1b0] sm:$0xff]
    %v1988 = vld [vmem:[#allocation2 + $0x1b8] sm:$0xff]
    %v1989 = vld [vmem:[#allocation2 + $0x1c0] sm:$0xff]
    %v1990 = vld [vmem:[#allocation2 + $0x1c8] sm:$0xff]
    %v1991 = vld [vmem:[#allocation2 + $0x1d0] sm:$0xff]
    %v1992 = vld [vmem:[#allocation2 + $0x1d8] sm:$0xff]
    %v1993 = vld [vmem:[#allocation2 + $0x1e0] sm:$0xff]
    %v1994 = vld [vmem:[#allocation2 + $0x1e8] sm:$0xff]
    %v1995 = vld [vmem:[#allocation2 + $0x1f0] sm:$0xff]
    %v1996 = vld [vmem:[#allocation2 + $0x1f8] sm:$0xff]
    %v1997 = vld [vmem:[#allocation2 + $0x200] sm:$0xff]
    %v1998 = vld [vmem:[#allocation2 + $0x208] sm:$0xff]
    %v1999 = vld [vmem:[#allocation2 + $0x210] sm:$0xff]
    %v2000 = vld [vmem:[#allocation2 + $0x218] sm:$0xff]
    %v2001 = vld [vmem:[#allocation2 + $0x220] sm:$0xff]
    %v2002 = vld [vmem:[#allocation2 + $0x228] sm:$0xff]
    %v2003 = vld [vmem:[#allocation2 + $0x230] sm:$0xff]
    %v2004 = vld [vmem:[#allocation2 + $0x238] sm:$0xff]
    %v2005 = vld [vmem:[#allocation2 + $0x240] sm:$0xff]
    %v2006 = vld [vmem:[#allocation2 + $0x248] sm:$0xff]
    %v2007 = vld [vmem:[#allocation2 + $0x250] sm:$0xff]
    %v2008 = vld [vmem:[#allocation2 + $0x258] sm:$0xff]
    %v2009 = vld [vmem:[#allocation2 + $0x260] sm:$0xff]
    %v2010 = vld [vmem:[#allocation2 + $0x268] sm:$0xff]
    %v2011 = vld [vmem:[#allocation2 + $0x270] sm:$0xff]
    %v2012 = vld [vmem:[#allocation2 + $0x278] sm:$0xff]
    %v2013 = vld [vmem:[#allocation2 + $0x280] sm:$0xff]
    %v2014 = vld [vmem:[#allocation2 + $0x288] sm:$0xff]
    %v2015 = vld [vmem:[#allocation2 + $0x290] sm:$0xff]
    %v2016 = vld [vmem:[#allocation2 + $0x298] sm:$0xff]
    %v2017 = vld [vmem:[#allocation2 + $0x2a0] sm:$0xff]
    %v2018 = vld [vmem:[#allocation2 + $0x2a8] sm:$0xff]
    %v2019 = vld [vmem:[#allocation2 + $0x2b0] sm:$0xff]
    %v2020 = vld [vmem:[#allocation2 + $0x2b8] sm:$0xff]
    %v2021 = vld [vmem:[#allocation2 + $0x2c0] sm:$0xff]
    %v2022 = vld [vmem:[#allocation2 + $0x2c8] sm:$0xff]
    %v2023 = vld [vmem:[#allocation2 + $0x2d0] sm:$0xff]
    %v2024 = vld [vmem:[#allocation2 + $0x2d8] sm:$0xff]
    %v2025 = vld [vmem:[#allocation2 + $0x2e0] sm:$0xff]
    %v2026 = vld [vmem:[#allocation2 + $0x2e8] sm:$0xff]
    %v2027 = vld [vmem:[#allocation2 + $0x2f0] sm:$0xff]
    %v2028 = vld [vmem:[#allocation2 + $0x2f8] sm:$0xff]
    %v2029 = vld [vmem:[#allocation2 + $0x300] sm:$0xff]
    %v2030 = vld [vmem:[#allocation2 + $0x308] sm:$0xff]
    %v2031 = vld [vmem:[#allocation2 + $0x310] sm:$0xff]
    %v2032 = vld [vmem:[#allocation2 + $0x318] sm:$0xff]
    %v2033 = vld [vmem:[#allocation2 + $0x320] sm:$0xff]
    %v2034 = vld [vmem:[#allocation2 + $0x328] sm:$0xff]
    %v2035 = vld [vmem:[#allocation2 + $0x330] sm:$0xff]
    %v2036 = vld [vmem:[#allocation2 + $0x338] sm:$0xff]
    %v2037 = vld [vmem:[#allocation2 + $0x340] sm:$0xff]
    %v2038 = vld [vmem:[#allocation2 + $0x348] sm:$0xff]
    %v2039 = vld [vmem:[#allocation2 + $0x350] sm:$0xff]
    %v2040 = vld [vmem:[#allocation2 + $0x358] sm:$0xff]
    %v2041 = vld [vmem:[#allocation2 + $0x360] sm:$0xff]
    %v2042 = vld [vmem:[#allocation2 + $0x368] sm:$0xff]
    %v2043 = vld [vmem:[#allocation2 + $0x370] sm:$0xff]
    %v2044 = vld [vmem:[#allocation2 + $0x378] sm:$0xff]
    %v2045 = vld [vmem:[%s6] sm:$0x7f]
    %v2047 = vlaneseq
    %v2048 = vshrl.u32 %v2047, 7
    %v2049 = vsub.s32 0, %v2048
    %v2050 = vrot.slane %v2045, %v2049
    %v2051 = vlaneseq
    %v2052 = vshrl.u32 %v2051, 7
    %v2053 = vsub.s32 1, %v2052
    %v2054 = vrot.slane %v2045, %v2053
    %v2055 = vlaneseq
    %v2056 = vshrl.u32 %v2055, 7
    %v2057 = vsub.s32 2, %v2056
    %v2058 = vrot.slane %v2045, %v2057
    %v2059 = vlaneseq
    %v2060 = vshrl.u32 %v2059, 7
    %v2061 = vsub.s32 3, %v2060
    %v2062 = vrot.slane %v2045, %v2061
    %v2063 = vlaneseq
    %v2064 = vshrl.u32 %v2063, 7
    %v2065 = vsub.s32 4, %v2064
    %v2066 = vrot.slane %v2045, %v2065
    %v2067 = vlaneseq
    %v2068 = vshrl.u32 %v2067, 7
    %v2069 = vsub.s32 5, %v2068
    %v2070 = vrot.slane %v2045, %v2069
    %v2071 = vlaneseq
    %v2072 = vshrl.u32 %v2071, 7
    %v2073 = vsub.s32 6, %v2072
    %v2074 = vrot.slane %v2045, %v2073
    %2082 = vmatprep.subr.bf16.mxu0 %v1934
    %2083 = vmatpush1.bf16.msra.mxu0 %v1933
    %2084 = vmatprep.subr.bf16.mxu0 %v1941
    %2085 = vmatpush1.bf16.msra.mxu0 %v1940
    %2086 = vmatprep.subr.bf16.mxu0 %v1948
    %2087 = vmatpush1.bf16.msra.mxu0 %v1947
    %2088 = vmatprep.subr.bf16.mxu0 %v1955
    %2089 = vmatpush1.bf16.msra.mxu0 %v1954
    %2090 = vmatprep.subr.bf16.mxu0 %v1962
    %2091 = vmatpush1.bf16.msra.mxu0 %v1961
    %2092 = vmatprep.subr.bf16.mxu0 %v1969
    %2093 = vmatpush1.bf16.msra.mxu0 %v1968
    %2094 = vmatprep.subr.bf16.mxu0 %v1976
    %2095 = vmatpush1.bf16.msra.mxu0 %v1975
    %2096 = vmatprep.subr.bf16.mxu0 %v1983
    %2097 = vmatpush1.bf16.msra.mxu0 %v1982
    %2098 = vmatprep.subr.bf16.mxu0 %v1990
    %2099 = vmatpush1.bf16.msra.mxu0 %v1989
    %2100 = vmatprep.subr.bf16.mxu0 %v1997
    %2101 = vmatpush1.bf16.msra.mxu0 %v1996
    %2102 = vmatprep.subr.bf16.mxu0 %v2004
    %2103 = vmatpush1.bf16.msra.mxu0 %v2003
    %2104 = vmatprep.subr.bf16.mxu0 %v2011
    %2105 = vmatpush1.bf16.msra.mxu0 %v2010
    %2106 = vmatprep.subr.bf16.mxu0 %v2018
    %2107 = vmatpush1.bf16.msra.mxu0 %v2017
    %2108 = vmatprep.subr.bf16.mxu0 %v2025
    %2109 = vmatpush1.bf16.msra.mxu0 %v2024
    %2110 = vmatprep.subr.bf16.mxu0 %v2032
    %2111 = vmatpush1.bf16.msra.mxu0 %v2031
    %2112 = vmatprep.subr.bf16.mxu0 %v2039
    %2113 = vmatpush1.bf16.msra.mxu0 %v2038
    %2114 = vmatprep.mubr.bf16.mxu0 %v1932
    %2115 = vmatmul.mubr.bf16.gmra.mrb[0].mxu0 %v1931
    %v2116 = vpop.f32.mrb[0].mxu0
    %v2117 = vadd.f32 %v2050, %v2116
    %v2118 = vpop.f32.mrb[0].mxu0
    %v2119 = vadd.f32 %v2054, %v2118
    %v2120 = vpop.f32.mrb[0].mxu0
    %v2121 = vpop.f32.mrb[0].mxu0
    %2122 = vdwg.mxu0
    %2123 = vmatprep.subr.bf16.mxu0 %v1936
    %2124 = vmatpush1.bf16.msra.mxu0 %v1935
    %2125 = vmatprep.subr.bf16.mxu0 %v1943
    %2126 = vmatpush1.bf16.msra.mxu0 %v1942
    %2127 = vmatprep.subr.bf16.mxu0 %v1950
    %2128 = vmatpush1.bf16.msra.mxu0 %v1949
    %2129 = vmatprep.subr.bf16.mxu0 %v1957
    %2130 = vmatpush1.bf16.msra.mxu0 %v1956
    %2131 = vmatprep.subr.bf16.mxu0 %v1964
    %2132 = vmatpush1.bf16.msra.mxu0 %v1963
    %2133 = vmatprep.subr.bf16.mxu0 %v1971
    %2134 = vmatpush1.bf16.msra.mxu0 %v1970
    %2135 = vmatprep.subr.bf16.mxu0 %v1978
    %2136 = vmatpush1.bf16.msra.mxu0 %v1977
    %2137 = vmatprep.subr.bf16.mxu0 %v1985
    %2138 = vmatpush1.bf16.msra.mxu0 %v1984
    %2139 = vmatprep.subr.bf16.mxu0 %v1992
    %2140 = vmatpush1.bf16.msra.mxu0 %v1991
    %2141 = vmatprep.subr.bf16.mxu0 %v1999
    %2142 = vmatpush1.bf16.msra.mxu0 %v1998
    %2143 = vmatprep.subr.bf16.mxu0 %v2006
    %2144 = vmatpush1.bf16.msra.mxu0 %v2005
    %2145 = vmatprep.subr.bf16.mxu0 %v2013
    %2146 = vmatpush1.bf16.msra.mxu0 %v2012
    %2147 = vmatprep.subr.bf16.mxu0 %v2020
    %2148 = vmatpush1.bf16.msra.mxu0 %v2019
    %2149 = vmatprep.subr.bf16.mxu0 %v2027
    %2150 = vmatpush1.bf16.msra.mxu0 %v2026
    %2151 = vmatprep.subr.bf16.mxu0 %v2034
    %2152 = vmatpush1.bf16.msra.mxu0 %v2033
    %2153 = vmatprep.subr.bf16.mxu0 %v2041
    %2154 = vmatpush1.bf16.msra.mxu0 %v2040
    %2155 = vmatprep.mubr.bf16.mxu0 %v1932
    %2156 = vmatmul.mubr.bf16.gmra.mrb[0].mxu0 %v1931
    %v2157 = vpop.f32.mrb[0].mxu0
    %v2158 = vadd.f32 %v2058, %v2157
    %v2159 = vpop.f32.mrb[0].mxu0
    %v2160 = vadd.f32 %v2062, %v2159
    %v2161 = vpop.f32.mrb[0].mxu0
    %v2162 = vpop.f32.mrb[0].mxu0
    %2163 = vdwg.mxu0
    %2164 = vmatprep.subr.bf16.mxu0 %v1938
    %2165 = vmatpush1.bf16.msra.mxu0 %v1937
    %2166 = vmatprep.subr.bf16.mxu0 %v1945
    %2167 = vmatpush1.bf16.msra.mxu0 %v1944
    %2168 = vmatprep.subr.bf16.mxu0 %v1952
    %2169 = vmatpush1.bf16.msra.mxu0 %v1951
    %2170 = vmatprep.subr.bf16.mxu0 %v1959
    %2171 = vmatpush1.bf16.msra.mxu0 %v1958
    %2172 = vmatprep.subr.bf16.mxu0 %v1966
    %2173 = vmatpush1.bf16.msra.mxu0 %v1965
    %2174 = vmatprep.subr.bf16.mxu0 %v1973
    %2175 = vmatpush1.bf16.msra.mxu0 %v1972
    %2176 = vmatprep.subr.bf16.mxu0 %v1980
    %2177 = vmatpush1.bf16.msra.mxu0 %v1979
    %2178 = vmatprep.subr.bf16.mxu0 %v1987
    %2179 = vmatpush1.bf16.msra.mxu0 %v1986
    %2180 = vmatprep.subr.bf16.mxu0 %v1994
    %2181 = vmatpush1.bf16.msra.mxu0 %v1993
    %2182 = vmatprep.subr.bf16.mxu0 %v2001
    %2183 = vmatpush1.bf16.msra.mxu0 %v2000
    %2184 = vmatprep.subr.bf16.mxu0 %v2008
    %2185 = vmatpush1.bf16.msra.mxu0 %v2007
    %2186 = vmatprep.subr.bf16.mxu0 %v2015
    %2187 = vmatpush1.bf16.msra.mxu0 %v2014
    %2188 = vmatprep.subr.bf16.mxu0 %v2022
    %2189 = vmatpush1.bf16.msra.mxu0 %v2021
    %2190 = vmatprep.subr.bf16.mxu0 %v2029
    %2191 = vmatpush1.bf16.msra.mxu0 %v2028
    %2192 = vmatprep.subr.bf16.mxu0 %v2036
    %2193 = vmatpush1.bf16.msra.mxu0 %v2035
    %2194 = vmatprep.subr.bf16.mxu0 %v2043
    %2195 = vmatpush1.bf16.msra.mxu0 %v2042
    %2196 = vmatprep.mubr.bf16.mxu0 %v1932
    %2197 = vmatmul.mubr.bf16.gmra.mrb[0].mxu0 %v1931
    %v2198 = vpop.f32.mrb[0].mxu0
    %v2199 = vadd.f32 %v2066, %v2198
    %v2200 = vpop.f32.mrb[0].mxu0
    %v2201 = vadd.f32 %v2070, %v2200
    %v2202 = vpop.f32.mrb[0].mxu0
    %v2203 = vpop.f32.mrb[0].mxu0
    %2204 = vdwg.mxu0
    %2205 = vmatprep.subr.bf16.mxu0 0
    %2206 = vmatpush1.bf16.msra.mxu0 %v1939
    %2207 = vmatprep.subr.bf16.mxu0 0
    %2208 = vmatpush1.bf16.msra.mxu0 %v1946
    %2209 = vmatprep.subr.bf16.mxu0 0
    %2210 = vmatpush1.bf16.msra.mxu0 %v1953
    %2211 = vmatprep.subr.bf16.mxu0 0
    %2212 = vmatpush1.bf16.msra.mxu0 %v1960
    %2213 = vmatprep.subr.bf16.mxu0 0
    %2214 = vmatpush1.bf16.msra.mxu0 %v1967
    %2215 = vmatprep.subr.bf16.mxu0 0
    %2216 = vmatpush1.bf16.msra.mxu0 %v1974
    %2217 = vmatprep.subr.bf16.mxu0 0
    %2218 = vmatpush1.bf16.msra.mxu0 %v1981
    %2219 = vmatprep.subr.bf16.mxu0 0
    %2220 = vmatpush1.bf16.msra.mxu0 %v1988
    %2221 = vmatprep.subr.bf16.mxu0 0
    %2222 = vmatpush1.bf16.msra.mxu0 %v1995
    %2223 = vmatprep.subr.bf16.mxu0 0
    %2224 = vmatpush1.bf16.msra.mxu0 %v2002
    %2225 = vmatprep.subr.bf16.mxu0 0
    %2226 = vmatpush1.bf16.msra.mxu0 %v2009
    %2227 = vmatprep.subr.bf16.mxu0 0
    %2228 = vmatpush1.bf16.msra.mxu0 %v2016
    %2229 = vmatprep.subr.bf16.mxu0 0
    %2230 = vmatpush1.bf16.msra.mxu0 %v2023
    %2231 = vmatprep.subr.bf16.mxu0 0
    %2232 = vmatpush1.bf16.msra.mxu0 %v2030
    %2233 = vmatprep.subr.bf16.mxu0 0
    %2234 = vmatpush1.bf16.msra.mxu0 %v2037
    %2235 = vmatprep.subr.bf16.mxu0 0
    %2236 = vmatpush1.bf16.msra.mxu0 %v2044
    %2237 = vmatprep.mubr.bf16.mxu0 %v1932
    %2238 = vmatmul.mubr.bf16.gmra.mrb[0].mxu0 %v1931
    %v2239 = vpop.f32.mrb[0].mxu0
    %v2240 = vadd.f32 %v2074, %v2239
    %v2241 = vpop.f32.mrb[0].mxu0
    %v2242 = vpop.f32.mrb[0].mxu0
    %v2243 = vpop.f32.mrb[0].mxu0
    %2244 = vdwg.mxu0
    %v2245 = vtanh.pop %v2117
    %v2246 = vtanh.pop %v2119
    %v2247 = vtanh.pop %v2158
    %v2248 = vtanh.pop %v2160
    %v2249 = vtanh.pop %v2199
    %v2250 = vtanh.pop %v2201
    %v2251 = vtanh.pop %v2240
    %v2252 = vpack.c.bf16 %v2245, %v2245
    %v2253 = vpack.c.bf16 %v2246, %v2246
    %v2254 = vpack.c.bf16 %v2247, %v2247
    %v2255 = vpack.c.bf16 %v2248, %v2248
    %v2256 = vpack.c.bf16 %v2249, %v2249
    %v2257 = vpack.c.bf16 %v2250, %v2250
    %v2258 = vpack.c.bf16 %v2251, %v2251
    %v2266 = vunpack.c.l.b16 %v2252
    %v2267 = vunpack.c.l.b16 %v2253
    %v2268 = vunpack.c.l.b16 %v2254
    %v2269 = vunpack.c.l.b16 %v2255
    %v2270 = vunpack.c.l.b16 %v2256
    %v2271 = vunpack.c.l.b16 %v2257
    %v2272 = vunpack.c.l.b16 %v2258
    %v2273 = vpack.c.b16 %v2267, %v2266
    %v2274 = vpack.c.b16 %v2269, %v2268
    %v2275 = vpack.c.b16 %v2271, %v2270
    %v2276 = vpack.c.b16 %v2272, %v2272
    %2281 = vst [vmem:[#allocation4] sm:$0xff] %v2273
    %2282 = vst [vmem:[#allocation4 + $0x8] sm:$0xff] %v2274
    %2283 = vst [vmem:[#allocation4 + $0x10] sm:$0xff] %v2275
    %vm2284 = vcmask 125952
    %2285 = vst.msk [vmem:[#allocation4 + $0x18] sm:$0xf] %vm2284, %v2276
    // Predicated region
    $region67: #{tpu_custom_call.1} parent=1 // pred_check
      _
    $region68: #{tpu_custom_call.1} parent=1 // pred_check_branch
      %2287 = sbr.rel (0) target = $region70
    $region69: #{tpu_custom_call.1} parent=1 // pred_region
      %s2289 = ssub.s32 448, 448
      %2290 = vsyncadd [#allocation5], %s2289
      %s2292 = sshll.u32 [#allocation4], 4
      %s2293 = int_to_ptr.vmem [resolvable:$true] %s2292
      %2295 = dma.vmem_to_hbm [thread:$0]  %s2293, 448, %s8, [#allocation5]
    $region70: #{tpu_custom_call.1} parent=1 // pred_fallthru
      _
    // Predicated region
    $region71: #{tpu_custom_call.1} parent=1 // pred_check
      _
    $region72: #{tpu_custom_call.1} parent=1 // pred_check_branch
      %2297 = sbr.rel (0) target = $region74
    $region73: #{tpu_custom_call.1} parent=1 // pred_region
      %2298 = dma.done [#allocation5], 448
    $region74: #{tpu_custom_call.1} parent=1 // pred_fallthru
      _
    %2299 = vsyncpa [#allocation5], 1
  %2300 = vsyncmov [#allocation3]
  %s2301 = vpop.sfrf %2300
  %p2302 = scmp.eq.s32.totalorder %s2301, 0
  %p2303 = pneg %p2302
  %2305 = shalt.err (%p2303)

</llo_original>
